<compile_context>
chip_gen: v6e
topology: v6e:2x2x1
jax: 0.10.0
libtpu: 0.0.40
codegen_flags: <defaults>
</compile_context>

<pallas_src>
import functools

import jax
import jax.numpy as jnp
from jax.experimental import pallas as pl
from jax.experimental.pallas import tpu as pltpu


# ---------------------------------------------------------------------------
# Packed-weight-slab layout (all sections 8-row aligned, 4H = 128 lanes wide).
# ---------------------------------------------------------------------------
def _slab_layout(I, H, C, D):
    def pad8(n):
        return ((n + 7) // 8) * 8

    sections = [("w_ih_enc", I), ("b_enc", 1), ("w_hh_enc", H),
                ("w_ih_dec", I), ("b_dec", 1), ("w_hh_dec", H),
                ("w_tail", H), ("tail_vec", 1)]
    offs, r = {}, 0
    for name, rows in sections:
        offs[name] = r
        r += pad8(rows)
    return offs, r


# ---------------------------------------------------------------------------
# Fused forward kernel factory (closes over static dims / slab offsets).
# ---------------------------------------------------------------------------
def _make_kernel(BB, T, I, H, C, D, OUT_W, offs):
    f32, bf16 = jnp.float32, jnp.bfloat16

    def kernel(x_ref, demov_ref, w_ref, out_ref):
        # ---- one-time weight loads from the packed slab (static row slices) ----
        w_ih_enc = w_ref[offs["w_ih_enc"]:offs["w_ih_enc"] + I, :]   # (I, 4H) 0.5-scaled i/f/o
        b_enc = w_ref[offs["b_enc"]:offs["b_enc"] + 1, :]            # (1, 4H)
        w_hh_enc = w_ref[offs["w_hh_enc"]:offs["w_hh_enc"] + H, :].astype(bf16)
        w_ih_dec = w_ref[offs["w_ih_dec"]:offs["w_ih_dec"] + I, :]
        b_dec = w_ref[offs["b_dec"]:offs["b_dec"] + 1, :]
        w_hh_dec = w_ref[offs["w_hh_dec"]:offs["w_hh_dec"] + H, :].astype(bf16)
        w_tail = w_ref[offs["w_tail"]:offs["w_tail"] + H, :]         # (H, 4H): [w_do | w_cls | 0]
        tv = w_ref[offs["tail_vec"]:offs["tail_vec"] + 1, :]         # [b_do|b_cls|w_rc|w_rd|b_r|0]

        # ---- hoisted input projections (+bias), OFF the serial critical path ----
        x_flat = x_ref[...].reshape(T * BB, I)                       # time-major: row t*BB + b
        px_enc = jnp.dot(x_flat, w_ih_enc, preferred_element_type=f32) + b_enc   # (T*BB, 4H)
        px_dec = jnp.dot(x_flat, w_ih_dec, preferred_element_type=f32) + b_dec   # (T*BB, 4H)

        def lstm_step(gx, h, c, w_hh_bf):
            # gx = x_t @ W_ih + b with i/f/o columns (and bias) pre-scaled by 0.5.
            # Recurrent matmul in bf16 (MXU-native), f32 accumulate; state stays f32.
            g = gx + jnp.dot(h.astype(bf16), w_hh_bf, preferred_element_type=f32)
            tg = jnp.tanh(g)                                  # ONE full-(BB,4H) EUP op
            i_g = 0.5 * tg[:, 0 * H:1 * H] + 0.5              # == sigmoid(unscaled preact)
            f_g = 0.5 * tg[:, 1 * H:2 * H] + 0.5
            g_g = tg[:, 2 * H:3 * H]
            o_g = 0.5 * tg[:, 3 * H:4 * H] + 0.5
            c_new = f_g * c + i_g * g_g
            h_new = o_g * jnp.tanh(c_new)
            return h_new, c_new

        # ---- EncoderRNN (zero init state); only (hn, cn) is needed downstream:
        #      encoded_x[:, 0, :] == flip(enc_out)[:, 0, :] == enc_out[:, T-1, :] == hn.
        h = jnp.zeros((BB, H), f32)
        c = jnp.zeros((BB, H), f32)
        # T=8: fully unrolled. TODO(synk): use lax.fori_loop(..., unroll=2..4) if T grows.
        for t in range(T):
            h, c = lstm_step(px_enc[t * BB:(t + 1) * BB, :], h, c, w_hh_enc)
        hn, cn = h, c

        # ---- DecoderRNN, init state (hn, cn).
        #      newinput = cat(zeros, flip(x,1))[:, :-1] folded into indexing:
        #      step 0 input is 0 (projection == bias), step t>=1 input is x[:, T-t].
        #      Output flip folded into the destination slot (step t -> slot T-1-t).
        hs = [None] * T
        hd, cd = hn, cn
        for t in range(T):
            gx = b_dec if t == 0 else px_dec[(T - t) * BB:(T - t + 1) * BB, :]
            hd, cd = lstm_step(gx, hd, cd, w_hh_dec)
            hs[T - 1 - t] = hd

        # ---- batched tail: [decoder hiddens in output-slot order ; hn] @ [w_do | w_cls]
        #      tv broadcast-adds b_do to cols [0:I] and b_cls to cols [I:I+C].
        M = jnp.concatenate(hs + [hn], axis=0)                          # ((T+1)*BB, H)
        full = jnp.dot(M, w_tail, preferred_element_type=f32) + tv      # ((T+1)*BB, 4H)
        logits = full[T * BB:(T + 1) * BB, I:I + C]                     # (BB, C)

        # ---- stable softmax -> two rank-1 regressions (VPU mul + lane reduce) -> sigmoid
        mmax = jnp.max(logits, axis=1, keepdims=True)
        e = jnp.exp(logits - mmax)
        probs = e / jnp.sum(e, axis=1, keepdims=True)      # exact divide (parity w/ reference)
        w_rc = tv[:, I + C:I + 2 * C]
        w_rd = tv[:, I + 2 * C:I + 2 * C + D]
        b_r = tv[:, I + 2 * C + D:I + 2 * C + D + 1]       # b_rc + b_rd pre-folded
        from_c = jnp.sum(probs * w_rc, axis=1, keepdims=True)
        from_v = jnp.sum(demov_ref[...] * w_rd, axis=1, keepdims=True)
        outcome = 0.5 * jnp.tanh(0.5 * (from_c + from_v + b_r)) + 0.5   # sigmoid

        # ---- single lane-dense output slab: [hn | decoded (t-major, T*I) | logits | outcome | pad]
        out_ref[...] = jnp.zeros((BB, OUT_W), f32)
        out_ref[:, 0:H] = hn
        for t in range(T):
            out_ref[:, H + t * I:H + (t + 1) * I] = full[t * BB:(t + 1) * BB, 0:I]
        out_ref[:, H + T * I:H + T * I + C] = logits
        out_ref[:, H + T * I + C:H + T * I + C + 1] = outcome

    return kernel


# ---------------------------------------------------------------------------
# model_2.forward(x, 'outcome_logistic_regression', demov) — one pallas_call.
# ---------------------------------------------------------------------------
def model2_outcome_logistic_regression(x, demov, wslab, meta, batch_block=8):
    """Returns (encoded_x[:, 0, :], decoded_x, output_c_no_activate, output_outcome)."""
    B, T, I = x.shape
    H, C, D, offs = meta["H"], meta["C"], meta["D"], meta["offs"]
    BB = min(batch_block, B)
    assert B % BB == 0, "batch must be a multiple of the batch block"
    nb = B // BB
    OUT_W = pl.cdiv(H + T * I + C + 1, 128) * 128

    # Layout plumbing only: time-major x gives contiguous (BB, I) per-step slices
    # of the hoisted input projections.
    x_tbi = jnp.transpose(x, (1, 0, 2))                    # (T, B, I)

    flops = (2 * 2 * T * B * I * 4 * H                     # hoisted input projections
             + 2 * 2 * T * B * H * 4 * H                   # recurrent h @ W_hh (enc+dec)
             + 2 * (T + 1) * B * H * 4 * H)                # fused dec-output + classifier matmul
    transcendentals = 2 * T * B * 5 * H + B * (C + 2)
    bytes_accessed = 4 * (x.size + demov.size + wslab.size + B * OUT_W)

    out = pl.pallas_call(
        _make_kernel(BB, T, I, H, C, D, OUT_W, offs),
        out_shape=jax.ShapeDtypeStruct((B, OUT_W), jnp.float32),
        grid=(nb,),
        in_specs=[pl.BlockSpec((T, BB, I), lambda i: (0, i, 0)),
                  pl.BlockSpec((BB, D), lambda i: (i, 0)),
                  pl.BlockSpec(wslab.shape, lambda i: (0, 0))],
        out_specs=pl.BlockSpec((BB, OUT_W), lambda i: (i, 0)),
        compiler_params=pltpu.CompilerParams(dimension_semantics=("parallel",)),
        cost_estimate=pl.CostEstimate(flops=flops,
                                      transcendentals=transcendentals,
                                      bytes_accessed=bytes_accessed),
    )(x_tbi, demov, wslab)

    enc0 = out[:, :H]
    decoded_x = out[:, H:H + T * I].reshape(B, T, I)
    logits = out[:, H + T * I:H + T * I + C]
    outcome = out[:, H + T * I + C:H + T * I + C + 1]
    return enc0, decoded_x, logits, outcome


# ---------------------------------------------------------------------------
# Parameters in natural PyTorch layout (mirrors model_2.init_weights / LSTM init).
# ---------------------------------------------------------------------------
def init_params(key, I, H, C, D):
    ks = jax.random.split(key, 12)
    u = lambda k, shape: jax.random.uniform(k, shape, jnp.float32, -0.1, 0.1)
    return dict(
        enc_w_ih=u(ks[0], (4 * H, I)), enc_w_hh=u(ks[1], (4 * H, H)),
        enc_b_ih=u(ks[2], (4 * H,)), enc_b_hh=u(ks[3], (4 * H,)),
        dec_w_ih=u(ks[4], (4 * H, I)), dec_w_hh=u(ks[5], (4 * H, H)),
        dec_b_ih=u(ks[6], (4 * H,)), dec_b_hh=u(ks[7], (4 * H,)),
        # model_2.init_weights(): linear weights ~ U(-0.1, 0.1), linear biases = 0.
        do_w=u(ks[8], (I, H)), do_b=jnp.zeros((I,), jnp.float32),
        cls_w=u(ks[9], (C, H)), cls_b=jnp.zeros((C,), jnp.float32),
        rc_w=u(ks[10], (1, C)), rc_b=jnp.zeros((1,), jnp.float32),
        rd_w=u(ks[11], (1, D)), rd_b=jnp.zeros((1,), jnp.float32),
    )


# ---------------------------------------------------------------------------
# Host-side packing: one f32 (rows, 4H) weight slab with static section offsets.
# i/f/o gate columns and biases are pre-scaled by 0.5 (single-tanh trick).
# ---------------------------------------------------------------------------
def pack_params(p):
    I = p["enc_w_ih"].shape[1]
    H = p["enc_w_hh"].shape[1]
    C = p["cls_w"].shape[0]
    D = p["rd_w"].shape[1]
    lanes = 4 * H
    assert lanes % 128 == 0, "packing assumes 4*H is a multiple of 128 lanes"
    assert lanes >= I + C and lanes >= I + 2 * C + D + 1
    offs, nrows = _slab_layout(I, H, C, D)

    # sigmoid(v) == 0.5*tanh(0.5*v)+0.5 -> pre-scale i/f/o columns & bias by 0.5.
    scale = jnp.concatenate([jnp.full((2 * H,), 0.5), jnp.ones((H,)),
                             jnp.full((H,), 0.5)]).astype(jnp.float32)

    def lstm_pack(w_ih, w_hh, b_ih, b_hh):
        return (w_ih.T * scale[None, :],                 # (I, 4H)
                ((b_ih + b_hh) * scale)[None, :],        # (1, 4H)
                w_hh.T * scale[None, :])                 # (H, 4H)

    slab = jnp.zeros((nrows, lanes), jnp.float32)

    def put(s, name, val):
        r = offs[name]
        return s.at[r:r + val.shape[0], :val.shape[1]].set(val)

    for pre, names in (("enc", ("w_ih_enc", "b_enc", "w_hh_enc")),
                       ("dec", ("w_ih_dec", "b_dec", "w_hh_dec"))):
        wih, b, whh = lstm_pack(p[f"{pre}_w_ih"], p[f"{pre}_w_hh"],
                                p[f"{pre}_b_ih"], p[f"{pre}_b_hh"])
        slab = put(slab, names[0], wih)
        slab = put(slab, names[1], b)
        slab = put(slab, names[2], whh)

    slab = put(slab, "w_tail", jnp.concatenate([p["do_w"].T, p["cls_w"].T], axis=1))
    tail_vec = jnp.concatenate([p["do_b"], p["cls_b"], p["rc_w"][0], p["rd_w"][0],
                                (p["rc_b"] + p["rd_b"]).reshape(1)])
    slab = put(slab, "tail_vec", tail_vec[None, :])

    meta = dict(I=I, H=H, C=C, D=D, offs=offs)
    return slab, meta


# ---------------------------------------------------------------------------
# Pure-JAX reference of the PyTorch forward (mask_BoolTensor=None). Uses the
# same bf16 recurrent matmul as the kernel so the parity check isolates the
# fused flip/shift indexing, gate order and the 0.5-prescale/tanh trick.
# ---------------------------------------------------------------------------
def reference_forward(x, demov, p):
    f32, bf16 = jnp.float32, jnp.bfloat16
    HI = jax.lax.Precision.HIGHEST
    B, T, I = x.shape
    H = p["enc_w_hh"].shape[1]

    def lstm(xseq, h, c, w_ih, w_hh, b):
        w_hh_t = w_hh.T.astype(bf16)
        w_ih_t = w_ih.T
        outs = []
        for t in range(xseq.shape[1]):
            g = (jnp.dot(xseq[:, t, :], w_ih_t, precision=HI) + b
                 + jnp.dot(h.astype(bf16), w_hh_t, preferred_element_type=f32))
            i_g = jax.nn.sigmoid(g[:, 0 * H:1 * H])
            f_g = jax.nn.sigmoid(g[:, 1 * H:2 * H])
            g_g = jnp.tanh(g[:, 2 * H:3 * H])
            o_g = jax.nn.sigmoid(g[:, 3 * H:4 * H])
            c = f_g * c + i_g * g_g
            h = o_g * jnp.tanh(c)
            outs.append(h)
        return jnp.stack(outs, axis=1), h, c

    z = jnp.zeros((B, H), f32)
    enc_out, hn, cn = lstm(x, z, z, p["enc_w_ih"], p["enc_w_hh"],
                           p["enc_b_ih"] + p["enc_b_hh"])
    encoded_x = jnp.flip(enc_out, axis=1)[:, 0, :]
    newinput = jnp.concatenate([jnp.zeros((B, 1, I), f32), jnp.flip(x, axis=1)],
                               axis=1)[:, :-1, :]
    dec_out, _, _ = lstm(newinput, hn, cn, p["dec_w_ih"], p["dec_w_hh"],
                         p["dec_b_ih"] + p["dec_b_hh"])
    decoded_x = jnp.dot(jnp.flip(dec_out, axis=1), p["do_w"].T, precision=HI) + p["do_b"]
    logits = jnp.dot(encoded_x, p["cls_w"].T, precision=HI) + p["cls_b"]
    probs = jax.nn.softmax(logits, axis=1)
    outcome = jax.nn.sigmoid(jnp.dot(probs, p["rc_w"].T, precision=HI) + p["rc_b"]
                             + jnp.dot(demov, p["rd_w"].T, precision=HI) + p["rd_b"])
    return encoded_x, decoded_x, logits, outcome


if __name__ == "__main__":
    # small shapes: batch=8, seq=8, input_size=8, nhidden=32, n_clusters=4, demov_fea=6
    B, T, I, H, C, D = 8, 8, 8, 32, 4, 6
    key = jax.random.PRNGKey(0)
    kx, kd, kp = jax.random.split(key, 3)
    x = jax.random.normal(kx, (B, T, I), jnp.float32)
    demov = jax.random.normal(kd, (B, D), jnp.float32)
    params = init_params(kp, I, H, C, D)
    wslab, meta = pack_params(params)

    fwd = jax.jit(functools.partial(model2_outcome_logistic_regression, meta=meta))
    enc0, decoded_x, logits, outcome = fwd(x, demov, wslab)
    jax.block_until_ready((enc0, decoded_x, logits, outcome))

    # shapes / sanity
    assert enc0.shape == (B, H) and decoded_x.shape == (B, T, I)
    assert logits.shape == (B, C) and outcome.shape == (B, 1)
    finite = (jnp.all(jnp.isfinite(enc0)) & jnp.all(jnp.isfinite(decoded_x))
              & jnp.all(jnp.isfinite(logits)) & jnp.all(jnp.isfinite(outcome)))
    assert bool(finite)
    assert bool(jnp.all((outcome > 0.0) & (outcome < 1.0)))

    # elementwise parity vs pure-JAX reference of the PyTorch forward
    # (tolerance sized for the bf16 recurrent matmul used in both paths).
    r_enc0, r_dec, r_logits, r_out = jax.jit(reference_forward)(x, demov, params)
    for name, a, b in (("encoded_x", enc0, r_enc0), ("decoded_x", decoded_x, r_dec),
                       ("logits", logits, r_logits), ("outcome", outcome, r_out)):
        err = float(jnp.max(jnp.abs(a - b)))
        assert err < 1e-2, f"{name} mismatch vs reference: max abs err {err}"

    print("KERNEL_OK")
</pallas_src>

<mosaic_0001>
module attributes {stable_mosaic.version = 11 : i64} {
  func.func @kernel(%arg0: i32, %arg1: memref<8x8x8xf32, #tpu.memory_space<vmem>>, %arg2: memref<8x6xf32, #tpu.memory_space<vmem>>, %arg3: memref<136x128xf32, #tpu.memory_space<vmem>>, %arg4: memref<8x128xf32, #tpu.memory_space<vmem>>) attributes {dimension_semantics = [#tpu.dimension_semantics<parallel>], iteration_bounds = array<i64: 1>, scalar_prefetch = 0 : i64, scratch_operands = 0 : i64, tpu.core_type = #tpu.core_type<tc>, window_params = [{transform_indices = @transform_0, window_bounds = array<i64: 8, 8, 8>}, {transform_indices = @transform_1, window_bounds = array<i64: 8, 6>}, {pipeline_mode = #tpu.pipeline_mode<synchronous>, transform_indices = @transform_2, window_bounds = array<i64: 136, 128>}, {transform_indices = @transform_3, window_bounds = array<i64: 8, 128>}]} {
    %c0 = arith.constant 0 : index
    %c0_0 = arith.constant 0 : index
    %0 = vector.load %arg3[%c0, %c0_0] : memref<136x128xf32, #tpu.memory_space<vmem>>, vector<8x128xf32>
    %c8 = arith.constant 8 : index
    %c0_1 = arith.constant 0 : index
    %1 = vector.load %arg3[%c8, %c0_1] : memref<136x128xf32, #tpu.memory_space<vmem>>, vector<1x128xf32>
    %c16 = arith.constant 16 : index
    %c0_2 = arith.constant 0 : index
    %2 = vector.load %arg3[%c16, %c0_2] : memref<136x128xf32, #tpu.memory_space<vmem>>, vector<32x128xf32>
    %3 = arith.truncf %2 : vector<32x128xf32> to vector<32x128xbf16>
    %c48 = arith.constant 48 : index
    %c0_3 = arith.constant 0 : index
    %4 = vector.load %arg3[%c48, %c0_3] : memref<136x128xf32, #tpu.memory_space<vmem>>, vector<8x128xf32>
    %c56 = arith.constant 56 : index
    %c0_4 = arith.constant 0 : index
    %5 = vector.load %arg3[%c56, %c0_4] : memref<136x128xf32, #tpu.memory_space<vmem>>, vector<1x128xf32>
    %c64 = arith.constant 64 : index
    %c0_5 = arith.constant 0 : index
    %6 = vector.load %arg3[%c64, %c0_5] : memref<136x128xf32, #tpu.memory_space<vmem>>, vector<32x128xf32>
    %7 = arith.truncf %6 : vector<32x128xf32> to vector<32x128xbf16>
    %c96 = arith.constant 96 : index
    %c0_6 = arith.constant 0 : index
    %8 = vector.load %arg3[%c96, %c0_6] : memref<136x128xf32, #tpu.memory_space<vmem>>, vector<32x128xf32>
    %c128 = arith.constant 128 : index
    %c0_7 = arith.constant 0 : index
    %9 = vector.load %arg3[%c128, %c0_7] : memref<136x128xf32, #tpu.memory_space<vmem>>, vector<1x128xf32>
    %c0_8 = arith.constant 0 : index
    %c0_9 = arith.constant 0 : index
    %c0_10 = arith.constant 0 : index
    %10 = vector.load %arg1[%c0_8, %c0_9, %c0_10] : memref<8x8x8xf32, #tpu.memory_space<vmem>>, vector<8x8x8xf32>
    %11 = vector.shape_cast %10 : vector<8x8x8xf32> to vector<64x8xf32>
    %cst = arith.constant dense<0.000000e+00> : vector<64x128xf32>
    %12 = tpu.matmul %11, %0, %cst {dimension_numbers = #tpu.dot_dimension_numbers<[1], [0], [0], [1], [0, 0, 1, 1], [], []>} : vector<64x8xf32>, vector<8x128xf32>, vector<64x128xf32> -> vector<64x128xf32>
    %13 = vector.broadcast %1 : vector<1x128xf32> to vector<64x128xf32>
    %14 = arith.addf %12, %13 : vector<64x128xf32>
    %cst_11 = arith.constant dense<0.000000e+00> : vector<64x128xf32>
    %15 = tpu.matmul %11, %4, %cst_11 {dimension_numbers = #tpu.dot_dimension_numbers<[1], [0], [0], [1], [0, 0, 1, 1], [], []>} : vector<64x8xf32>, vector<8x128xf32>, vector<64x128xf32> -> vector<64x128xf32>
    %16 = vector.broadcast %5 : vector<1x128xf32> to vector<64x128xf32>
    %17 = arith.addf %15, %16 : vector<64x128xf32>
    %cst_12 = arith.constant 0.000000e+00 : f32
    %18 = vector.broadcast %cst_12 : f32 to vector<8x32xf32>
    %cst_13 = arith.constant 0.000000e+00 : f32
    %19 = vector.broadcast %cst_13 : f32 to vector<8x32xf32>
    %20 = vector.extract_strided_slice %14 {offsets = [0, 0], sizes = [8, 128], strides = [1, 1]} : vector<64x128xf32> to vector<8x128xf32>
    %21 = arith.truncf %18 : vector<8x32xf32> to vector<8x32xbf16>
    %cst_14 = arith.constant dense<0.000000e+00> : vector<8x128xf32>
    %22 = tpu.matmul %21, %3, %cst_14 {dimension_numbers = #tpu.dot_dimension_numbers<[1], [0], [0], [1], [0, 0, 1, 1], [], []>} : vector<8x32xbf16>, vector<32x128xbf16>, vector<8x128xf32> -> vector<8x128xf32>
    %23 = arith.addf %20, %22 : vector<8x128xf32>
    %24 = math.tanh %23 : vector<8x128xf32>
    %25 = vector.extract_strided_slice %24 {offsets = [0, 0], sizes = [8, 32], strides = [1, 1]} : vector<8x128xf32> to vector<8x32xf32>
    %cst_15 = arith.constant 5.000000e-01 : f32
    %26 = vector.broadcast %cst_15 : f32 to vector<8x32xf32>
    %27 = arith.mulf %26, %25 : vector<8x32xf32>
    %cst_16 = arith.constant 5.000000e-01 : f32
    %28 = vector.broadcast %cst_16 : f32 to vector<8x32xf32>
    %29 = arith.addf %27, %28 : vector<8x32xf32>
    %30 = vector.extract_strided_slice %24 {offsets = [0, 32], sizes = [8, 32], strides = [1, 1]} : vector<8x128xf32> to vector<8x32xf32>
    %cst_17 = arith.constant 5.000000e-01 : f32
    %31 = vector.broadcast %cst_17 : f32 to vector<8x32xf32>
    %32 = arith.mulf %31, %30 : vector<8x32xf32>
    %cst_18 = arith.constant 5.000000e-01 : f32
    %33 = vector.broadcast %cst_18 : f32 to vector<8x32xf32>
    %34 = arith.addf %32, %33 : vector<8x32xf32>
    %35 = vector.extract_strided_slice %24 {offsets = [0, 64], sizes = [8, 32], strides = [1, 1]} : vector<8x128xf32> to vector<8x32xf32>
    %36 = vector.extract_strided_slice %24 {offsets = [0, 96], sizes = [8, 32], strides = [1, 1]} : vector<8x128xf32> to vector<8x32xf32>
    %cst_19 = arith.constant 5.000000e-01 : f32
    %37 = vector.broadcast %cst_19 : f32 to vector<8x32xf32>
    %38 = arith.mulf %37, %36 : vector<8x32xf32>
    %cst_20 = arith.constant 5.000000e-01 : f32
    %39 = vector.broadcast %cst_20 : f32 to vector<8x32xf32>
    %40 = arith.addf %38, %39 : vector<8x32xf32>
    %41 = arith.mulf %34, %19 : vector<8x32xf32>
    %42 = arith.mulf %29, %35 : vector<8x32xf32>
    %43 = arith.addf %41, %42 : vector<8x32xf32>
    %44 = math.tanh %43 : vector<8x32xf32>
    %45 = arith.mulf %40, %44 : vector<8x32xf32>
    %46 = vector.extract_strided_slice %14 {offsets = [8, 0], sizes = [8, 128], strides = [1, 1]} : vector<64x128xf32> to vector<8x128xf32>
    %47 = arith.truncf %45 : vector<8x32xf32> to vector<8x32xbf16>
    %cst_21 = arith.constant dense<0.000000e+00> : vector<8x128xf32>
    %48 = tpu.matmul %47, %3, %cst_21 {dimension_numbers = #tpu.dot_dimension_numbers<[1], [0], [0], [1], [0, 0, 1, 1], [], []>} : vector<8x32xbf16>, vector<32x128xbf16>, vector<8x128xf32> -> vector<8x128xf32>
    %49 = arith.addf %46, %48 : vector<8x128xf32>
    %50 = math.tanh %49 : vector<8x128xf32>
    %51 = vector.extract_strided_slice %50 {offsets = [0, 0], sizes = [8, 32], strides = [1, 1]} : vector<8x128xf32> to vector<8x32xf32>
    %cst_22 = arith.constant 5.000000e-01 : f32
    %52 = vector.broadcast %cst_22 : f32 to vector<8x32xf32>
    %53 = arith.mulf %52, %51 : vector<8x32xf32>
    %cst_23 = arith.constant 5.000000e-01 : f32
    %54 = vector.broadcast %cst_23 : f32 to vector<8x32xf32>
    %55 = arith.addf %53, %54 : vector<8x32xf32>
    %56 = vector.extract_strided_slice %50 {offsets = [0, 32], sizes = [8, 32], strides = [1, 1]} : vector<8x128xf32> to vector<8x32xf32>
    %cst_24 = arith.constant 5.000000e-01 : f32
    %57 = vector.broadcast %cst_24 : f32 to vector<8x32xf32>
    %58 = arith.mulf %57, %56 : vector<8x32xf32>
    %cst_25 = arith.constant 5.000000e-01 : f32
    %59 = vector.broadcast %cst_25 : f32 to vector<8x32xf32>
    %60 = arith.addf %58, %59 : vector<8x32xf32>
    %61 = vector.extract_strided_slice %50 {offsets = [0, 64], sizes = [8, 32], strides = [1, 1]} : vector<8x128xf32> to vector<8x32xf32>
    %62 = vector.extract_strided_slice %50 {offsets = [0, 96], sizes = [8, 32], strides = [1, 1]} : vector<8x128xf32> to vector<8x32xf32>
    %cst_26 = arith.constant 5.000000e-01 : f32
    %63 = vector.broadcast %cst_26 : f32 to vector<8x32xf32>
    %64 = arith.mulf %63, %62 : vector<8x32xf32>
    %cst_27 = arith.constant 5.000000e-01 : f32
    %65 = vector.broadcast %cst_27 : f32 to vector<8x32xf32>
    %66 = arith.addf %64, %65 : vector<8x32xf32>
    %67 = arith.mulf %60, %43 : vector<8x32xf32>
    %68 = arith.mulf %55, %61 : vector<8x32xf32>
    %69 = arith.addf %67, %68 : vector<8x32xf32>
    %70 = math.tanh %69 : vector<8x32xf32>
    %71 = arith.mulf %66, %70 : vector<8x32xf32>
    %72 = vector.extract_strided_slice %14 {offsets = [16, 0], sizes = [8, 128], strides = [1, 1]} : vector<64x128xf32> to vector<8x128xf32>
    %73 = arith.truncf %71 : vector<8x32xf32> to vector<8x32xbf16>
    %cst_28 = arith.constant dense<0.000000e+00> : vector<8x128xf32>
    %74 = tpu.matmul %73, %3, %cst_28 {dimension_numbers = #tpu.dot_dimension_numbers<[1], [0], [0], [1], [0, 0, 1, 1], [], []>} : vector<8x32xbf16>, vector<32x128xbf16>, vector<8x128xf32> -> vector<8x128xf32>
    %75 = arith.addf %72, %74 : vector<8x128xf32>
    %76 = math.tanh %75 : vector<8x128xf32>
    %77 = vector.extract_strided_slice %76 {offsets = [0, 0], sizes = [8, 32], strides = [1, 1]} : vector<8x128xf32> to vector<8x32xf32>
    %cst_29 = arith.constant 5.000000e-01 : f32
    %78 = vector.broadcast %cst_29 : f32 to vector<8x32xf32>
    %79 = arith.mulf %78, %77 : vector<8x32xf32>
    %cst_30 = arith.constant 5.000000e-01 : f32
    %80 = vector.broadcast %cst_30 : f32 to vector<8x32xf32>
    %81 = arith.addf %79, %80 : vector<8x32xf32>
    %82 = vector.extract_strided_slice %76 {offsets = [0, 32], sizes = [8, 32], strides = [1, 1]} : vector<8x128xf32> to vector<8x32xf32>
    %cst_31 = arith.constant 5.000000e-01 : f32
    %83 = vector.broadcast %cst_31 : f32 to vector<8x32xf32>
    %84 = arith.mulf %83, %82 : vector<8x32xf32>
    %cst_32 = arith.constant 5.000000e-01 : f32
    %85 = vector.broadcast %cst_32 : f32 to vector<8x32xf32>
    %86 = arith.addf %84, %85 : vector<8x32xf32>
    %87 = vector.extract_strided_slice %76 {offsets = [0, 64], sizes = [8, 32], strides = [1, 1]} : vector<8x128xf32> to vector<8x32xf32>
    %88 = vector.extract_strided_slice %76 {offsets = [0, 96], sizes = [8, 32], strides = [1, 1]} : vector<8x128xf32> to vector<8x32xf32>
    %cst_33 = arith.constant 5.000000e-01 : f32
    %89 = vector.broadcast %cst_33 : f32 to vector<8x32xf32>
    %90 = arith.mulf %89, %88 : vector<8x32xf32>
    %cst_34 = arith.constant 5.000000e-01 : f32
    %91 = vector.broadcast %cst_34 : f32 to vector<8x32xf32>
    %92 = arith.addf %90, %91 : vector<8x32xf32>
    %93 = arith.mulf %86, %69 : vector<8x32xf32>
    %94 = arith.mulf %81, %87 : vector<8x32xf32>
    %95 = arith.addf %93, %94 : vector<8x32xf32>
    %96 = math.tanh %95 : vector<8x32xf32>
    %97 = arith.mulf %92, %96 : vector<8x32xf32>
    %98 = vector.extract_strided_slice %14 {offsets = [24, 0], sizes = [8, 128], strides = [1, 1]} : vector<64x128xf32> to vector<8x128xf32>
    %99 = arith.truncf %97 : vector<8x32xf32> to vector<8x32xbf16>
    %cst_35 = arith.constant dense<0.000000e+00> : vector<8x128xf32>
    %100 = tpu.matmul %99, %3, %cst_35 {dimension_numbers = #tpu.dot_dimension_numbers<[1], [0], [0], [1], [0, 0, 1, 1], [], []>} : vector<8x32xbf16>, vector<32x128xbf16>, vector<8x128xf32> -> vector<8x128xf32>
    %101 = arith.addf %98, %100 : vector<8x128xf32>
    %102 = math.tanh %101 : vector<8x128xf32>
    %103 = vector.extract_strided_slice %102 {offsets = [0, 0], sizes = [8, 32], strides = [1, 1]} : vector<8x128xf32> to vector<8x32xf32>
    %cst_36 = arith.constant 5.000000e-01 : f32
    %104 = vector.broadcast %cst_36 : f32 to vector<8x32xf32>
    %105 = arith.mulf %104, %103 : vector<8x32xf32>
    %cst_37 = arith.constant 5.000000e-01 : f32
    %106 = vector.broadcast %cst_37 : f32 to vector<8x32xf32>
    %107 = arith.addf %105, %106 : vector<8x32xf32>
    %108 = vector.extract_strided_slice %102 {offsets = [0, 32], sizes = [8, 32], strides = [1, 1]} : vector<8x128xf32> to vector<8x32xf32>
    %cst_38 = arith.constant 5.000000e-01 : f32
    %109 = vector.broadcast %cst_38 : f32 to vector<8x32xf32>
    %110 = arith.mulf %109, %108 : vector<8x32xf32>
    %cst_39 = arith.constant 5.000000e-01 : f32
    %111 = vector.broadcast %cst_39 : f32 to vector<8x32xf32>
    %112 = arith.addf %110, %111 : vector<8x32xf32>
    %113 = vector.extract_strided_slice %102 {offsets = [0, 64], sizes = [8, 32], strides = [1, 1]} : vector<8x128xf32> to vector<8x32xf32>
    %114 = vector.extract_strided_slice %102 {offsets = [0, 96], sizes = [8, 32], strides = [1, 1]} : vector<8x128xf32> to vector<8x32xf32>
    %cst_40 = arith.constant 5.000000e-01 : f32
    %115 = vector.broadcast %cst_40 : f32 to vector<8x32xf32>
    %116 = arith.mulf %115, %114 : vector<8x32xf32>
    %cst_41 = arith.constant 5.000000e-01 : f32
    %117 = vector.broadcast %cst_41 : f32 to vector<8x32xf32>
    %118 = arith.addf %116, %117 : vector<8x32xf32>
    %119 = arith.mulf %112, %95 : vector<8x32xf32>
    %120 = arith.mulf %107, %113 : vector<8x32xf32>
    %121 = arith.addf %119, %120 : vector<8x32xf32>
    %122 = math.tanh %121 : vector<8x32xf32>
    %123 = arith.mulf %118, %122 : vector<8x32xf32>
    %124 = vector.extract_strided_slice %14 {offsets = [32, 0], sizes = [8, 128], strides = [1, 1]} : vector<64x128xf32> to vector<8x128xf32>
    %125 = arith.truncf %123 : vector<8x32xf32> to vector<8x32xbf16>
    %cst_42 = arith.constant dense<0.000000e+00> : vector<8x128xf32>
    %126 = tpu.matmul %125, %3, %cst_42 {dimension_numbers = #tpu.dot_dimension_numbers<[1], [0], [0], [1], [0, 0, 1, 1], [], []>} : vector<8x32xbf16>, vector<32x128xbf16>, vector<8x128xf32> -> vector<8x128xf32>
    %127 = arith.addf %124, %126 : vector<8x128xf32>
    %128 = math.tanh %127 : vector<8x128xf32>
    %129 = vector.extract_strided_slice %128 {offsets = [0, 0], sizes = [8, 32], strides = [1, 1]} : vector<8x128xf32> to vector<8x32xf32>
    %cst_43 = arith.constant 5.000000e-01 : f32
    %130 = vector.broadcast %cst_43 : f32 to vector<8x32xf32>
    %131 = arith.mulf %130, %129 : vector<8x32xf32>
    %cst_44 = arith.constant 5.000000e-01 : f32
    %132 = vector.broadcast %cst_44 : f32 to vector<8x32xf32>
    %133 = arith.addf %131, %132 : vector<8x32xf32>
    %134 = vector.extract_strided_slice %128 {offsets = [0, 32], sizes = [8, 32], strides = [1, 1]} : vector<8x128xf32> to vector<8x32xf32>
    %cst_45 = arith.constant 5.000000e-01 : f32
    %135 = vector.broadcast %cst_45 : f32 to vector<8x32xf32>
    %136 = arith.mulf %135, %134 : vector<8x32xf32>
    %cst_46 = arith.constant 5.000000e-01 : f32
    %137 = vector.broadcast %cst_46 : f32 to vector<8x32xf32>
    %138 = arith.addf %136, %137 : vector<8x32xf32>
    %139 = vector.extract_strided_slice %128 {offsets = [0, 64], sizes = [8, 32], strides = [1, 1]} : vector<8x128xf32> to vector<8x32xf32>
    %140 = vector.extract_strided_slice %128 {offsets = [0, 96], sizes = [8, 32], strides = [1, 1]} : vector<8x128xf32> to vector<8x32xf32>
    %cst_47 = arith.constant 5.000000e-01 : f32
    %141 = vector.broadcast %cst_47 : f32 to vector<8x32xf32>
    %142 = arith.mulf %141, %140 : vector<8x32xf32>
    %cst_48 = arith.constant 5.000000e-01 : f32
    %143 = vector.broadcast %cst_48 : f32 to vector<8x32xf32>
    %144 = arith.addf %142, %143 : vector<8x32xf32>
    %145 = arith.mulf %138, %121 : vector<8x32xf32>
    %146 = arith.mulf %133, %139 : vector<8x32xf32>
    %147 = arith.addf %145, %146 : vector<8x32xf32>
    %148 = math.tanh %147 : vector<8x32xf32>
    %149 = arith.mulf %144, %148 : vector<8x32xf32>
    %150 = vector.extract_strided_slice %14 {offsets = [40, 0], sizes = [8, 128], strides = [1, 1]} : vector<64x128xf32> to vector<8x128xf32>
    %151 = arith.truncf %149 : vector<8x32xf32> to vector<8x32xbf16>
    %cst_49 = arith.constant dense<0.000000e+00> : vector<8x128xf32>
    %152 = tpu.matmul %151, %3, %cst_49 {dimension_numbers = #tpu.dot_dimension_numbers<[1], [0], [0], [1], [0, 0, 1, 1], [], []>} : vector<8x32xbf16>, vector<32x128xbf16>, vector<8x128xf32> -> vector<8x128xf32>
    %153 = arith.addf %150, %152 : vector<8x128xf32>
    %154 = math.tanh %153 : vector<8x128xf32>
    %155 = vector.extract_strided_slice %154 {offsets = [0, 0], sizes = [8, 32], strides = [1, 1]} : vector<8x128xf32> to vector<8x32xf32>
    %cst_50 = arith.constant 5.000000e-01 : f32
    %156 = vector.broadcast %cst_50 : f32 to vector<8x32xf32>
    %157 = arith.mulf %156, %155 : vector<8x32xf32>
    %cst_51 = arith.constant 5.000000e-01 : f32
    %158 = vector.broadcast %cst_51 : f32 to vector<8x32xf32>
    %159 = arith.addf %157, %158 : vector<8x32xf32>
    %160 = vector.extract_strided_slice %154 {offsets = [0, 32], sizes = [8, 32], strides = [1, 1]} : vector<8x128xf32> to vector<8x32xf32>
    %cst_52 = arith.constant 5.000000e-01 : f32
    %161 = vector.broadcast %cst_52 : f32 to vector<8x32xf32>
    %162 = arith.mulf %161, %160 : vector<8x32xf32>
    %cst_53 = arith.constant 5.000000e-01 : f32
    %163 = vector.broadcast %cst_53 : f32 to vector<8x32xf32>
    %164 = arith.addf %162, %163 : vector<8x32xf32>
    %165 = vector.extract_strided_slice %154 {offsets = [0, 64], sizes = [8, 32], strides = [1, 1]} : vector<8x128xf32> to vector<8x32xf32>
    %166 = vector.extract_strided_slice %154 {offsets = [0, 96], sizes = [8, 32], strides = [1, 1]} : vector<8x128xf32> to vector<8x32xf32>
    %cst_54 = arith.constant 5.000000e-01 : f32
    %167 = vector.broadcast %cst_54 : f32 to vector<8x32xf32>
    %168 = arith.mulf %167, %166 : vector<8x32xf32>
    %cst_55 = arith.constant 5.000000e-01 : f32
    %169 = vector.broadcast %cst_55 : f32 to vector<8x32xf32>
    %170 = arith.addf %168, %169 : vector<8x32xf32>
    %171 = arith.mulf %164, %147 : vector<8x32xf32>
    %172 = arith.mulf %159, %165 : vector<8x32xf32>
    %173 = arith.addf %171, %172 : vector<8x32xf32>
    %174 = math.tanh %173 : vector<8x32xf32>
    %175 = arith.mulf %170, %174 : vector<8x32xf32>
    %176 = vector.extract_strided_slice %14 {offsets = [48, 0], sizes = [8, 128], strides = [1, 1]} : vector<64x128xf32> to vector<8x128xf32>
    %177 = arith.truncf %175 : vector<8x32xf32> to vector<8x32xbf16>
    %cst_56 = arith.constant dense<0.000000e+00> : vector<8x128xf32>
    %178 = tpu.matmul %177, %3, %cst_56 {dimension_numbers = #tpu.dot_dimension_numbers<[1], [0], [0], [1], [0, 0, 1, 1], [], []>} : vector<8x32xbf16>, vector<32x128xbf16>, vector<8x128xf32> -> vector<8x128xf32>
    %179 = arith.addf %176, %178 : vector<8x128xf32>
    %180 = math.tanh %179 : vector<8x128xf32>
    %181 = vector.extract_strided_slice %180 {offsets = [0, 0], sizes = [8, 32], strides = [1, 1]} : vector<8x128xf32> to vector<8x32xf32>
    %cst_57 = arith.constant 5.000000e-01 : f32
    %182 = vector.broadcast %cst_57 : f32 to vector<8x32xf32>
    %183 = arith.mulf %182, %181 : vector<8x32xf32>
    %cst_58 = arith.constant 5.000000e-01 : f32
    %184 = vector.broadcast %cst_58 : f32 to vector<8x32xf32>
    %185 = arith.addf %183, %184 : vector<8x32xf32>
    %186 = vector.extract_strided_slice %180 {offsets = [0, 32], sizes = [8, 32], strides = [1, 1]} : vector<8x128xf32> to vector<8x32xf32>
    %cst_59 = arith.constant 5.000000e-01 : f32
    %187 = vector.broadcast %cst_59 : f32 to vector<8x32xf32>
    %188 = arith.mulf %187, %186 : vector<8x32xf32>
    %cst_60 = arith.constant 5.000000e-01 : f32
    %189 = vector.broadcast %cst_60 : f32 to vector<8x32xf32>
    %190 = arith.addf %188, %189 : vector<8x32xf32>
    %191 = vector.extract_strided_slice %180 {offsets = [0, 64], sizes = [8, 32], strides = [1, 1]} : vector<8x128xf32> to vector<8x32xf32>
    %192 = vector.extract_strided_slice %180 {offsets = [0, 96], sizes = [8, 32], strides = [1, 1]} : vector<8x128xf32> to vector<8x32xf32>
    %cst_61 = arith.constant 5.000000e-01 : f32
    %193 = vector.broadcast %cst_61 : f32 to vector<8x32xf32>
    %194 = arith.mulf %193, %192 : vector<8x32xf32>
    %cst_62 = arith.constant 5.000000e-01 : f32
    %195 = vector.broadcast %cst_62 : f32 to vector<8x32xf32>
    %196 = arith.addf %194, %195 : vector<8x32xf32>
    %197 = arith.mulf %190, %173 : vector<8x32xf32>
    %198 = arith.mulf %185, %191 : vector<8x32xf32>
    %199 = arith.addf %197, %198 : vector<8x32xf32>
    %200 = math.tanh %199 : vector<8x32xf32>
    %201 = arith.mulf %196, %200 : vector<8x32xf32>
    %202 = vector.extract_strided_slice %14 {offsets = [56, 0], sizes = [8, 128], strides = [1, 1]} : vector<64x128xf32> to vector<8x128xf32>
    %203 = arith.truncf %201 : vector<8x32xf32> to vector<8x32xbf16>
    %cst_63 = arith.constant dense<0.000000e+00> : vector<8x128xf32>
    %204 = tpu.matmul %203, %3, %cst_63 {dimension_numbers = #tpu.dot_dimension_numbers<[1], [0], [0], [1], [0, 0, 1, 1], [], []>} : vector<8x32xbf16>, vector<32x128xbf16>, vector<8x128xf32> -> vector<8x128xf32>
    %205 = arith.addf %202, %204 : vector<8x128xf32>
    %206 = math.tanh %205 : vector<8x128xf32>
    %207 = vector.extract_strided_slice %206 {offsets = [0, 0], sizes = [8, 32], strides = [1, 1]} : vector<8x128xf32> to vector<8x32xf32>
    %cst_64 = arith.constant 5.000000e-01 : f32
    %208 = vector.broadcast %cst_64 : f32 to vector<8x32xf32>
    %209 = arith.mulf %208, %207 : vector<8x32xf32>
    %cst_65 = arith.constant 5.000000e-01 : f32
    %210 = vector.broadcast %cst_65 : f32 to vector<8x32xf32>
    %211 = arith.addf %209, %210 : vector<8x32xf32>
    %212 = vector.extract_strided_slice %206 {offsets = [0, 32], sizes = [8, 32], strides = [1, 1]} : vector<8x128xf32> to vector<8x32xf32>
    %cst_66 = arith.constant 5.000000e-01 : f32
    %213 = vector.broadcast %cst_66 : f32 to vector<8x32xf32>
    %214 = arith.mulf %213, %212 : vector<8x32xf32>
    %cst_67 = arith.constant 5.000000e-01 : f32
    %215 = vector.broadcast %cst_67 : f32 to vector<8x32xf32>
    %216 = arith.addf %214, %215 : vector<8x32xf32>
    %217 = vector.extract_strided_slice %206 {offsets = [0, 64], sizes = [8, 32], strides = [1, 1]} : vector<8x128xf32> to vector<8x32xf32>
    %218 = vector.extract_strided_slice %206 {offsets = [0, 96], sizes = [8, 32], strides = [1, 1]} : vector<8x128xf32> to vector<8x32xf32>
    %cst_68 = arith.constant 5.000000e-01 : f32
    %219 = vector.broadcast %cst_68 : f32 to vector<8x32xf32>
    %220 = arith.mulf %219, %218 : vector<8x32xf32>
    %cst_69 = arith.constant 5.000000e-01 : f32
    %221 = vector.broadcast %cst_69 : f32 to vector<8x32xf32>
    %222 = arith.addf %220, %221 : vector<8x32xf32>
    %223 = arith.mulf %216, %199 : vector<8x32xf32>
    %224 = arith.mulf %211, %217 : vector<8x32xf32>
    %225 = arith.addf %223, %224 : vector<8x32xf32>
    %226 = math.tanh %225 : vector<8x32xf32>
    %227 = arith.mulf %222, %226 : vector<8x32xf32>
    %228 = arith.truncf %227 : vector<8x32xf32> to vector<8x32xbf16>
    %cst_70 = arith.constant dense<0.000000e+00> : vector<8x128xf32>
    %229 = tpu.matmul %228, %7, %cst_70 {dimension_numbers = #tpu.dot_dimension_numbers<[1], [0], [0], [1], [0, 0, 1, 1], [], []>} : vector<8x32xbf16>, vector<32x128xbf16>, vector<8x128xf32> -> vector<8x128xf32>
    %230 = vector.broadcast %5 : vector<1x128xf32> to vector<8x128xf32>
    %231 = arith.addf %230, %229 : vector<8x128xf32>
    %232 = math.tanh %231 : vector<8x128xf32>
    %233 = vector.extract_strided_slice %232 {offsets = [0, 0], sizes = [8, 32], strides = [1, 1]} : vector<8x128xf32> to vector<8x32xf32>
    %cst_71 = arith.constant 5.000000e-01 : f32
    %234 = vector.broadcast %cst_71 : f32 to vector<8x32xf32>
    %235 = arith.mulf %234, %233 : vector<8x32xf32>
    %cst_72 = arith.constant 5.000000e-01 : f32
    %236 = vector.broadcast %cst_72 : f32 to vector<8x32xf32>
    %237 = arith.addf %235, %236 : vector<8x32xf32>
    %238 = vector.extract_strided_slice %232 {offsets = [0, 32], sizes = [8, 32], strides = [1, 1]} : vector<8x128xf32> to vector<8x32xf32>
    %cst_73 = arith.constant 5.000000e-01 : f32
    %239 = vector.broadcast %cst_73 : f32 to vector<8x32xf32>
    %240 = arith.mulf %239, %238 : vector<8x32xf32>
    %cst_74 = arith.constant 5.000000e-01 : f32
    %241 = vector.broadcast %cst_74 : f32 to vector<8x32xf32>
    %242 = arith.addf %240, %241 : vector<8x32xf32>
    %243 = vector.extract_strided_slice %232 {offsets = [0, 64], sizes = [8, 32], strides = [1, 1]} : vector<8x128xf32> to vector<8x32xf32>
    %244 = vector.extract_strided_slice %232 {offsets = [0, 96], sizes = [8, 32], strides = [1, 1]} : vector<8x128xf32> to vector<8x32xf32>
    %cst_75 = arith.constant 5.000000e-01 : f32
    %245 = vector.broadcast %cst_75 : f32 to vector<8x32xf32>
    %246 = arith.mulf %245, %244 : vector<8x32xf32>
    %cst_76 = arith.constant 5.000000e-01 : f32
    %247 = vector.broadcast %cst_76 : f32 to vector<8x32xf32>
    %248 = arith.addf %246, %247 : vector<8x32xf32>
    %249 = arith.mulf %242, %225 : vector<8x32xf32>
    %250 = arith.mulf %237, %243 : vector<8x32xf32>
    %251 = arith.addf %249, %250 : vector<8x32xf32>
    %252 = math.tanh %251 : vector<8x32xf32>
    %253 = arith.mulf %248, %252 : vector<8x32xf32>
    %254 = vector.extract_strided_slice %17 {offsets = [56, 0], sizes = [8, 128], strides = [1, 1]} : vector<64x128xf32> to vector<8x128xf32>
    %255 = arith.truncf %253 : vector<8x32xf32> to vector<8x32xbf16>
    %cst_77 = arith.constant dense<0.000000e+00> : vector<8x128xf32>
    %256 = tpu.matmul %255, %7, %cst_77 {dimension_numbers = #tpu.dot_dimension_numbers<[1], [0], [0], [1], [0, 0, 1, 1], [], []>} : vector<8x32xbf16>, vector<32x128xbf16>, vector<8x128xf32> -> vector<8x128xf32>
    %257 = arith.addf %254, %256 : vector<8x128xf32>
    %258 = math.tanh %257 : vector<8x128xf32>
    %259 = vector.extract_strided_slice %258 {offsets = [0, 0], sizes = [8, 32], strides = [1, 1]} : vector<8x128xf32> to vector<8x32xf32>
    %cst_78 = arith.constant 5.000000e-01 : f32
    %260 = vector.broadcast %cst_78 : f32 to vector<8x32xf32>
    %261 = arith.mulf %260, %259 : vector<8x32xf32>
    %cst_79 = arith.constant 5.000000e-01 : f32
    %262 = vector.broadcast %cst_79 : f32 to vector<8x32xf32>
    %263 = arith.addf %261, %262 : vector<8x32xf32>
    %264 = vector.extract_strided_slice %258 {offsets = [0, 32], sizes = [8, 32], strides = [1, 1]} : vector<8x128xf32> to vector<8x32xf32>
    %cst_80 = arith.constant 5.000000e-01 : f32
    %265 = vector.broadcast %cst_80 : f32 to vector<8x32xf32>
    %266 = arith.mulf %265, %264 : vector<8x32xf32>
    %cst_81 = arith.constant 5.000000e-01 : f32
    %267 = vector.broadcast %cst_81 : f32 to vector<8x32xf32>
    %268 = arith.addf %266, %267 : vector<8x32xf32>
    %269 = vector.extract_strided_slice %258 {offsets = [0, 64], sizes = [8, 32], strides = [1, 1]} : vector<8x128xf32> to vector<8x32xf32>
    %270 = vector.extract_strided_slice %258 {offsets = [0, 96], sizes = [8, 32], strides = [1, 1]} : vector<8x128xf32> to vector<8x32xf32>
    %cst_82 = arith.constant 5.000000e-01 : f32
    %271 = vector.broadcast %cst_82 : f32 to vector<8x32xf32>
    %272 = arith.mulf %271, %270 : vector<8x32xf32>
    %cst_83 = arith.constant 5.000000e-01 : f32
    %273 = vector.broadcast %cst_83 : f32 to vector<8x32xf32>
    %274 = arith.addf %272, %273 : vector<8x32xf32>
    %275 = arith.mulf %268, %251 : vector<8x32xf32>
    %276 = arith.mulf %263, %269 : vector<8x32xf32>
    %277 = arith.addf %275, %276 : vector<8x32xf32>
    %278 = math.tanh %277 : vector<8x32xf32>
    %279 = arith.mulf %274, %278 : vector<8x32xf32>
    %280 = vector.extract_strided_slice %17 {offsets = [48, 0], sizes = [8, 128], strides = [1, 1]} : vector<64x128xf32> to vector<8x128xf32>
    %281 = arith.truncf %279 : vector<8x32xf32> to vector<8x32xbf16>
    %cst_84 = arith.constant dense<0.000000e+00> : vector<8x128xf32>
    %282 = tpu.matmul %281, %7, %cst_84 {dimension_numbers = #tpu.dot_dimension_numbers<[1], [0], [0], [1], [0, 0, 1, 1], [], []>} : vector<8x32xbf16>, vector<32x128xbf16>, vector<8x128xf32> -> vector<8x128xf32>
    %283 = arith.addf %280, %282 : vector<8x128xf32>
    %284 = math.tanh %283 : vector<8x128xf32>
    %285 = vector.extract_strided_slice %284 {offsets = [0, 0], sizes = [8, 32], strides = [1, 1]} : vector<8x128xf32> to vector<8x32xf32>
    %cst_85 = arith.constant 5.000000e-01 : f32
    %286 = vector.broadcast %cst_85 : f32 to vector<8x32xf32>
    %287 = arith.mulf %286, %285 : vector<8x32xf32>
    %cst_86 = arith.constant 5.000000e-01 : f32
    %288 = vector.broadcast %cst_86 : f32 to vector<8x32xf32>
    %289 = arith.addf %287, %288 : vector<8x32xf32>
    %290 = vector.extract_strided_slice %284 {offsets = [0, 32], sizes = [8, 32], strides = [1, 1]} : vector<8x128xf32> to vector<8x32xf32>
    %cst_87 = arith.constant 5.000000e-01 : f32
    %291 = vector.broadcast %cst_87 : f32 to vector<8x32xf32>
    %292 = arith.mulf %291, %290 : vector<8x32xf32>
    %cst_88 = arith.constant 5.000000e-01 : f32
    %293 = vector.broadcast %cst_88 : f32 to vector<8x32xf32>
    %294 = arith.addf %292, %293 : vector<8x32xf32>
    %295 = vector.extract_strided_slice %284 {offsets = [0, 64], sizes = [8, 32], strides = [1, 1]} : vector<8x128xf32> to vector<8x32xf32>
    %296 = vector.extract_strided_slice %284 {offsets = [0, 96], sizes = [8, 32], strides = [1, 1]} : vector<8x128xf32> to vector<8x32xf32>
    %cst_89 = arith.constant 5.000000e-01 : f32
    %297 = vector.broadcast %cst_89 : f32 to vector<8x32xf32>
    %298 = arith.mulf %297, %296 : vector<8x32xf32>
    %cst_90 = arith.constant 5.000000e-01 : f32
    %299 = vector.broadcast %cst_90 : f32 to vector<8x32xf32>
    %300 = arith.addf %298, %299 : vector<8x32xf32>
    %301 = arith.mulf %294, %277 : vector<8x32xf32>
    %302 = arith.mulf %289, %295 : vector<8x32xf32>
    %303 = arith.addf %301, %302 : vector<8x32xf32>
    %304 = math.tanh %303 : vector<8x32xf32>
    %305 = arith.mulf %300, %304 : vector<8x32xf32>
    %306 = vector.extract_strided_slice %17 {offsets = [40, 0], sizes = [8, 128], strides = [1, 1]} : vector<64x128xf32> to vector<8x128xf32>
    %307 = arith.truncf %305 : vector<8x32xf32> to vector<8x32xbf16>
    %cst_91 = arith.constant dense<0.000000e+00> : vector<8x128xf32>
    %308 = tpu.matmul %307, %7, %cst_91 {dimension_numbers = #tpu.dot_dimension_numbers<[1], [0], [0], [1], [0, 0, 1, 1], [], []>} : vector<8x32xbf16>, vector<32x128xbf16>, vector<8x128xf32> -> vector<8x128xf32>
    %309 = arith.addf %306, %308 : vector<8x128xf32>
    %310 = math.tanh %309 : vector<8x128xf32>
    %311 = vector.extract_strided_slice %310 {offsets = [0, 0], sizes = [8, 32], strides = [1, 1]} : vector<8x128xf32> to vector<8x32xf32>
    %cst_92 = arith.constant 5.000000e-01 : f32
    %312 = vector.broadcast %cst_92 : f32 to vector<8x32xf32>
    %313 = arith.mulf %312, %311 : vector<8x32xf32>
    %cst_93 = arith.constant 5.000000e-01 : f32
    %314 = vector.broadcast %cst_93 : f32 to vector<8x32xf32>
    %315 = arith.addf %313, %314 : vector<8x32xf32>
    %316 = vector.extract_strided_slice %310 {offsets = [0, 32], sizes = [8, 32], strides = [1, 1]} : vector<8x128xf32> to vector<8x32xf32>
    %cst_94 = arith.constant 5.000000e-01 : f32
    %317 = vector.broadcast %cst_94 : f32 to vector<8x32xf32>
    %318 = arith.mulf %317, %316 : vector<8x32xf32>
    %cst_95 = arith.constant 5.000000e-01 : f32
    %319 = vector.broadcast %cst_95 : f32 to vector<8x32xf32>
    %320 = arith.addf %318, %319 : vector<8x32xf32>
    %321 = vector.extract_strided_slice %310 {offsets = [0, 64], sizes = [8, 32], strides = [1, 1]} : vector<8x128xf32> to vector<8x32xf32>
    %322 = vector.extract_strided_slice %310 {offsets = [0, 96], sizes = [8, 32], strides = [1, 1]} : vector<8x128xf32> to vector<8x32xf32>
    %cst_96 = arith.constant 5.000000e-01 : f32
    %323 = vector.broadcast %cst_96 : f32 to vector<8x32xf32>
    %324 = arith.mulf %323, %322 : vector<8x32xf32>
    %cst_97 = arith.constant 5.000000e-01 : f32
    %325 = vector.broadcast %cst_97 : f32 to vector<8x32xf32>
    %326 = arith.addf %324, %325 : vector<8x32xf32>
    %327 = arith.mulf %320, %303 : vector<8x32xf32>
    %328 = arith.mulf %315, %321 : vector<8x32xf32>
    %329 = arith.addf %327, %328 : vector<8x32xf32>
    %330 = math.tanh %329 : vector<8x32xf32>
    %331 = arith.mulf %326, %330 : vector<8x32xf32>
    %332 = vector.extract_strided_slice %17 {offsets = [32, 0], sizes = [8, 128], strides = [1, 1]} : vector<64x128xf32> to vector<8x128xf32>
    %333 = arith.truncf %331 : vector<8x32xf32> to vector<8x32xbf16>
    %cst_98 = arith.constant dense<0.000000e+00> : vector<8x128xf32>
    %334 = tpu.matmul %333, %7, %cst_98 {dimension_numbers = #tpu.dot_dimension_numbers<[1], [0], [0], [1], [0, 0, 1, 1], [], []>} : vector<8x32xbf16>, vector<32x128xbf16>, vector<8x128xf32> -> vector<8x128xf32>
    %335 = arith.addf %332, %334 : vector<8x128xf32>
    %336 = math.tanh %335 : vector<8x128xf32>
    %337 = vector.extract_strided_slice %336 {offsets = [0, 0], sizes = [8, 32], strides = [1, 1]} : vector<8x128xf32> to vector<8x32xf32>
    %cst_99 = arith.constant 5.000000e-01 : f32
    %338 = vector.broadcast %cst_99 : f32 to vector<8x32xf32>
    %339 = arith.mulf %338, %337 : vector<8x32xf32>
    %cst_100 = arith.constant 5.000000e-01 : f32
    %340 = vector.broadcast %cst_100 : f32 to vector<8x32xf32>
    %341 = arith.addf %339, %340 : vector<8x32xf32>
    %342 = vector.extract_strided_slice %336 {offsets = [0, 32], sizes = [8, 32], strides = [1, 1]} : vector<8x128xf32> to vector<8x32xf32>
    %cst_101 = arith.constant 5.000000e-01 : f32
    %343 = vector.broadcast %cst_101 : f32 to vector<8x32xf32>
    %344 = arith.mulf %343, %342 : vector<8x32xf32>
    %cst_102 = arith.constant 5.000000e-01 : f32
    %345 = vector.broadcast %cst_102 : f32 to vector<8x32xf32>
    %346 = arith.addf %344, %345 : vector<8x32xf32>
    %347 = vector.extract_strided_slice %336 {offsets = [0, 64], sizes = [8, 32], strides = [1, 1]} : vector<8x128xf32> to vector<8x32xf32>
    %348 = vector.extract_strided_slice %336 {offsets = [0, 96], sizes = [8, 32], strides = [1, 1]} : vector<8x128xf32> to vector<8x32xf32>
    %cst_103 = arith.constant 5.000000e-01 : f32
    %349 = vector.broadcast %cst_103 : f32 to vector<8x32xf32>
    %350 = arith.mulf %349, %348 : vector<8x32xf32>
    %cst_104 = arith.constant 5.000000e-01 : f32
    %351 = vector.broadcast %cst_104 : f32 to vector<8x32xf32>
    %352 = arith.addf %350, %351 : vector<8x32xf32>
    %353 = arith.mulf %346, %329 : vector<8x32xf32>
    %354 = arith.mulf %341, %347 : vector<8x32xf32>
    %355 = arith.addf %353, %354 : vector<8x32xf32>
    %356 = math.tanh %355 : vector<8x32xf32>
    %357 = arith.mulf %352, %356 : vector<8x32xf32>
    %358 = vector.extract_strided_slice %17 {offsets = [24, 0], sizes = [8, 128], strides = [1, 1]} : vector<64x128xf32> to vector<8x128xf32>
    %359 = arith.truncf %357 : vector<8x32xf32> to vector<8x32xbf16>
    %cst_105 = arith.constant dense<0.000000e+00> : vector<8x128xf32>
    %360 = tpu.matmul %359, %7, %cst_105 {dimension_numbers = #tpu.dot_dimension_numbers<[1], [0], [0], [1], [0, 0, 1, 1], [], []>} : vector<8x32xbf16>, vector<32x128xbf16>, vector<8x128xf32> -> vector<8x128xf32>
    %361 = arith.addf %358, %360 : vector<8x128xf32>
    %362 = math.tanh %361 : vector<8x128xf32>
    %363 = vector.extract_strided_slice %362 {offsets = [0, 0], sizes = [8, 32], strides = [1, 1]} : vector<8x128xf32> to vector<8x32xf32>
    %cst_106 = arith.constant 5.000000e-01 : f32
    %364 = vector.broadcast %cst_106 : f32 to vector<8x32xf32>
    %365 = arith.mulf %364, %363 : vector<8x32xf32>
    %cst_107 = arith.constant 5.000000e-01 : f32
    %366 = vector.broadcast %cst_107 : f32 to vector<8x32xf32>
    %367 = arith.addf %365, %366 : vector<8x32xf32>
    %368 = vector.extract_strided_slice %362 {offsets = [0, 32], sizes = [8, 32], strides = [1, 1]} : vector<8x128xf32> to vector<8x32xf32>
    %cst_108 = arith.constant 5.000000e-01 : f32
    %369 = vector.broadcast %cst_108 : f32 to vector<8x32xf32>
    %370 = arith.mulf %369, %368 : vector<8x32xf32>
    %cst_109 = arith.constant 5.000000e-01 : f32
    %371 = vector.broadcast %cst_109 : f32 to vector<8x32xf32>
    %372 = arith.addf %370, %371 : vector<8x32xf32>
    %373 = vector.extract_strided_slice %362 {offsets = [0, 64], sizes = [8, 32], strides = [1, 1]} : vector<8x128xf32> to vector<8x32xf32>
    %374 = vector.extract_strided_slice %362 {offsets = [0, 96], sizes = [8, 32], strides = [1, 1]} : vector<8x128xf32> to vector<8x32xf32>
    %cst_110 = arith.constant 5.000000e-01 : f32
    %375 = vector.broadcast %cst_110 : f32 to vector<8x32xf32>
    %376 = arith.mulf %375, %374 : vector<8x32xf32>
    %cst_111 = arith.constant 5.000000e-01 : f32
    %377 = vector.broadcast %cst_111 : f32 to vector<8x32xf32>
    %378 = arith.addf %376, %377 : vector<8x32xf32>
    %379 = arith.mulf %372, %355 : vector<8x32xf32>
    %380 = arith.mulf %367, %373 : vector<8x32xf32>
    %381 = arith.addf %379, %380 : vector<8x32xf32>
    %382 = math.tanh %381 : vector<8x32xf32>
    %383 = arith.mulf %378, %382 : vector<8x32xf32>
    %384 = vector.extract_strided_slice %17 {offsets = [16, 0], sizes = [8, 128], strides = [1, 1]} : vector<64x128xf32> to vector<8x128xf32>
    %385 = arith.truncf %383 : vector<8x32xf32> to vector<8x32xbf16>
    %cst_112 = arith.constant dense<0.000000e+00> : vector<8x128xf32>
    %386 = tpu.matmul %385, %7, %cst_112 {dimension_numbers = #tpu.dot_dimension_numbers<[1], [0], [0], [1], [0, 0, 1, 1], [], []>} : vector<8x32xbf16>, vector<32x128xbf16>, vector<8x128xf32> -> vector<8x128xf32>
    %387 = arith.addf %384, %386 : vector<8x128xf32>
    %388 = math.tanh %387 : vector<8x128xf32>
    %389 = vector.extract_strided_slice %388 {offsets = [0, 0], sizes = [8, 32], strides = [1, 1]} : vector<8x128xf32> to vector<8x32xf32>
    %cst_113 = arith.constant 5.000000e-01 : f32
    %390 = vector.broadcast %cst_113 : f32 to vector<8x32xf32>
    %391 = arith.mulf %390, %389 : vector<8x32xf32>
    %cst_114 = arith.constant 5.000000e-01 : f32
    %392 = vector.broadcast %cst_114 : f32 to vector<8x32xf32>
    %393 = arith.addf %391, %392 : vector<8x32xf32>
    %394 = vector.extract_strided_slice %388 {offsets = [0, 32], sizes = [8, 32], strides = [1, 1]} : vector<8x128xf32> to vector<8x32xf32>
    %cst_115 = arith.constant 5.000000e-01 : f32
    %395 = vector.broadcast %cst_115 : f32 to vector<8x32xf32>
    %396 = arith.mulf %395, %394 : vector<8x32xf32>
    %cst_116 = arith.constant 5.000000e-01 : f32
    %397 = vector.broadcast %cst_116 : f32 to vector<8x32xf32>
    %398 = arith.addf %396, %397 : vector<8x32xf32>
    %399 = vector.extract_strided_slice %388 {offsets = [0, 64], sizes = [8, 32], strides = [1, 1]} : vector<8x128xf32> to vector<8x32xf32>
    %400 = vector.extract_strided_slice %388 {offsets = [0, 96], sizes = [8, 32], strides = [1, 1]} : vector<8x128xf32> to vector<8x32xf32>
    %cst_117 = arith.constant 5.000000e-01 : f32
    %401 = vector.broadcast %cst_117 : f32 to vector<8x32xf32>
    %402 = arith.mulf %401, %400 : vector<8x32xf32>
    %cst_118 = arith.constant 5.000000e-01 : f32
    %403 = vector.broadcast %cst_118 : f32 to vector<8x32xf32>
    %404 = arith.addf %402, %403 : vector<8x32xf32>
    %405 = arith.mulf %398, %381 : vector<8x32xf32>
    %406 = arith.mulf %393, %399 : vector<8x32xf32>
    %407 = arith.addf %405, %406 : vector<8x32xf32>
    %408 = math.tanh %407 : vector<8x32xf32>
    %409 = arith.mulf %404, %408 : vector<8x32xf32>
    %410 = vector.extract_strided_slice %17 {offsets = [8, 0], sizes = [8, 128], strides = [1, 1]} : vector<64x128xf32> to vector<8x128xf32>
    %411 = arith.truncf %409 : vector<8x32xf32> to vector<8x32xbf16>
    %cst_119 = arith.constant dense<0.000000e+00> : vector<8x128xf32>
    %412 = tpu.matmul %411, %7, %cst_119 {dimension_numbers = #tpu.dot_dimension_numbers<[1], [0], [0], [1], [0, 0, 1, 1], [], []>} : vector<8x32xbf16>, vector<32x128xbf16>, vector<8x128xf32> -> vector<8x128xf32>
    %413 = arith.addf %410, %412 : vector<8x128xf32>
    %414 = math.tanh %413 : vector<8x128xf32>
    %415 = vector.extract_strided_slice %414 {offsets = [0, 0], sizes = [8, 32], strides = [1, 1]} : vector<8x128xf32> to vector<8x32xf32>
    %cst_120 = arith.constant 5.000000e-01 : f32
    %416 = vector.broadcast %cst_120 : f32 to vector<8x32xf32>
    %417 = arith.mulf %416, %415 : vector<8x32xf32>
    %cst_121 = arith.constant 5.000000e-01 : f32
    %418 = vector.broadcast %cst_121 : f32 to vector<8x32xf32>
    %419 = arith.addf %417, %418 : vector<8x32xf32>
    %420 = vector.extract_strided_slice %414 {offsets = [0, 32], sizes = [8, 32], strides = [1, 1]} : vector<8x128xf32> to vector<8x32xf32>
    %cst_122 = arith.constant 5.000000e-01 : f32
    %421 = vector.broadcast %cst_122 : f32 to vector<8x32xf32>
    %422 = arith.mulf %421, %420 : vector<8x32xf32>
    %cst_123 = arith.constant 5.000000e-01 : f32
    %423 = vector.broadcast %cst_123 : f32 to vector<8x32xf32>
    %424 = arith.addf %422, %423 : vector<8x32xf32>
    %425 = vector.extract_strided_slice %414 {offsets = [0, 64], sizes = [8, 32], strides = [1, 1]} : vector<8x128xf32> to vector<8x32xf32>
    %426 = vector.extract_strided_slice %414 {offsets = [0, 96], sizes = [8, 32], strides = [1, 1]} : vector<8x128xf32> to vector<8x32xf32>
    %cst_124 = arith.constant 5.000000e-01 : f32
    %427 = vector.broadcast %cst_124 : f32 to vector<8x32xf32>
    %428 = arith.mulf %427, %426 : vector<8x32xf32>
    %cst_125 = arith.constant 5.000000e-01 : f32
    %429 = vector.broadcast %cst_125 : f32 to vector<8x32xf32>
    %430 = arith.addf %428, %429 : vector<8x32xf32>
    %431 = arith.mulf %424, %407 : vector<8x32xf32>
    %432 = arith.mulf %419, %425 : vector<8x32xf32>
    %433 = arith.addf %431, %432 : vector<8x32xf32>
    %434 = math.tanh %433 : vector<8x32xf32>
    %435 = arith.mulf %430, %434 : vector<8x32xf32>
    %436 = tpu.concatenate %435, %409, %383, %357, %331, %305, %279, %253, %227 in 0 : vector<8x32xf32>, vector<8x32xf32>, vector<8x32xf32>, vector<8x32xf32>, vector<8x32xf32>, vector<8x32xf32>, vector<8x32xf32>, vector<8x32xf32>, vector<8x32xf32> -> vector<72x32xf32>
    %cst_126 = arith.constant dense<0.000000e+00> : vector<72x128xf32>
    %437 = tpu.matmul %436, %8, %cst_126 {dimension_numbers = #tpu.dot_dimension_numbers<[1], [0], [0], [1], [0, 0, 1, 1], [], []>} : vector<72x32xf32>, vector<32x128xf32>, vector<72x128xf32> -> vector<72x128xf32>
    %438 = vector.broadcast %9 : vector<1x128xf32> to vector<72x128xf32>
    %439 = arith.addf %437, %438 : vector<72x128xf32>
    %440 = vector.extract_strided_slice %439 {offsets = [64, 8], sizes = [8, 4], strides = [1, 1]} : vector<72x128xf32> to vector<8x4xf32>
    %cst_127 = arith.constant dense<0xFF800000> : vector<8xf32>
    %441 = vector.multi_reduction <maximumf>, %440, %cst_127 [1] : vector<8x4xf32> to vector<8xf32>
    %442 = vector.shape_cast %441 : vector<8xf32> to vector<8x1xf32>
    %443 = vector.broadcast %442 : vector<8x1xf32> to vector<8x4xf32>
    %444 = arith.subf %440, %443 : vector<8x4xf32>
    %445 = math.exp %444 : vector<8x4xf32>
    %cst_128 = arith.constant dense<0.000000e+00> : vector<8xf32>
    %446 = vector.multi_reduction <add>, %445, %cst_128 [1] : vector<8x4xf32> to vector<8xf32>
    %447 = vector.shape_cast %446 : vector<8xf32> to vector<8x1xf32>
    %448 = vector.broadcast %447 : vector<8x1xf32> to vector<8x4xf32>
    %449 = arith.divf %445, %448 : vector<8x4xf32>
    %450 = vector.extract_strided_slice %9 {offsets = [0, 12], sizes = [1, 4], strides = [1, 1]} : vector<1x128xf32> to vector<1x4xf32>
    %451 = vector.extract_strided_slice %9 {offsets = [0, 16], sizes = [1, 6], strides = [1, 1]} : vector<1x128xf32> to vector<1x6xf32>
    %452 = vector.extract_strided_slice %9 {offsets = [0, 22], sizes = [1, 1], strides = [1, 1]} : vector<1x128xf32> to vector<1x1xf32>
    %453 = vector.broadcast %450 : vector<1x4xf32> to vector<8x4xf32>
    %454 = arith.mulf %449, %453 : vector<8x4xf32>
    %cst_129 = arith.constant dense<0.000000e+00> : vector<8xf32>
    %455 = vector.multi_reduction <add>, %454, %cst_129 [1] : vector<8x4xf32> to vector<8xf32>
    %456 = vector.shape_cast %455 : vector<8xf32> to vector<8x1xf32>
    %c0_130 = arith.constant 0 : index
    %c0_131 = arith.constant 0 : index
    %457 = vector.load %arg2[%c0_130, %c0_131] : memref<8x6xf32, #tpu.memory_space<vmem>>, vector<8x6xf32>
    %458 = vector.broadcast %451 : vector<1x6xf32> to vector<8x6xf32>
    %459 = arith.mulf %457, %458 : vector<8x6xf32>
    %cst_132 = arith.constant dense<0.000000e+00> : vector<8xf32>
    %460 = vector.multi_reduction <add>, %459, %cst_132 [1] : vector<8x6xf32> to vector<8xf32>
    %461 = vector.shape_cast %460 : vector<8xf32> to vector<8x1xf32>
    %462 = arith.addf %456, %461 : vector<8x1xf32>
    %463 = vector.broadcast %452 : vector<1x1xf32> to vector<8x1xf32>
    %464 = arith.addf %462, %463 : vector<8x1xf32>
    %cst_133 = arith.constant 5.000000e-01 : f32
    %465 = vector.broadcast %cst_133 : f32 to vector<8x1xf32>
    %466 = arith.mulf %465, %464 : vector<8x1xf32>
    %467 = math.tanh %466 : vector<8x1xf32>
    %cst_134 = arith.constant 5.000000e-01 : f32
    %468 = vector.broadcast %cst_134 : f32 to vector<8x1xf32>
    %469 = arith.mulf %468, %467 : vector<8x1xf32>
    %cst_135 = arith.constant 5.000000e-01 : f32
    %470 = vector.broadcast %cst_135 : f32 to vector<8x1xf32>
    %471 = arith.addf %469, %470 : vector<8x1xf32>
    %cst_136 = arith.constant 0.000000e+00 : f32
    %472 = vector.broadcast %cst_136 : f32 to vector<8x128xf32>
    %c0_137 = arith.constant 0 : index
    %c0_138 = arith.constant 0 : index
    %473 = vector.load %arg4[%c0_137, %c0_138] : memref<8x128xf32, #tpu.memory_space<vmem>>, vector<8x128xf32>
    tpu.vector_store %arg4[%c0_137, %c0_138], %472 {strides = array<i32>} : memref<8x128xf32, #tpu.memory_space<vmem>>, vector<8x128xf32>,
    %c0_139 = arith.constant 0 : index
    %c0_140 = arith.constant 0 : index
    %474 = vector.load %arg4[%c0_139, %c0_140] : memref<8x128xf32, #tpu.memory_space<vmem>>, vector<8x32xf32>
    tpu.vector_store %arg4[%c0_139, %c0_140], %227 {strides = array<i32>} : memref<8x128xf32, #tpu.memory_space<vmem>>, vector<8x32xf32>,
    %475 = vector.extract_strided_slice %439 {offsets = [0, 0], sizes = [8, 8], strides = [1, 1]} : vector<72x128xf32> to vector<8x8xf32>
    %c0_141 = arith.constant 0 : index
    %c32 = arith.constant 32 : index
    %476 = vector.load %arg4[%c0_141, %c32] : memref<8x128xf32, #tpu.memory_space<vmem>>, vector<8x8xf32>
    tpu.vector_store %arg4[%c0_141, %c32], %475 {strides = array<i32>} : memref<8x128xf32, #tpu.memory_space<vmem>>, vector<8x8xf32>,
    %477 = vector.extract_strided_slice %439 {offsets = [8, 0], sizes = [8, 8], strides = [1, 1]} : vector<72x128xf32> to vector<8x8xf32>
    %c0_142 = arith.constant 0 : index
    %c40 = arith.constant 40 : index
    %478 = vector.load %arg4[%c0_142, %c40] : memref<8x128xf32, #tpu.memory_space<vmem>>, vector<8x8xf32>
    tpu.vector_store %arg4[%c0_142, %c40], %477 {strides = array<i32>} : memref<8x128xf32, #tpu.memory_space<vmem>>, vector<8x8xf32>,
    %479 = vector.extract_strided_slice %439 {offsets = [16, 0], sizes = [8, 8], strides = [1, 1]} : vector<72x128xf32> to vector<8x8xf32>
    %c0_143 = arith.constant 0 : index
    %c48_144 = arith.constant 48 : index
    %480 = vector.load %arg4[%c0_143, %c48_144] : memref<8x128xf32, #tpu.memory_space<vmem>>, vector<8x8xf32>
    tpu.vector_store %arg4[%c0_143, %c48_144], %479 {strides = array<i32>} : memref<8x128xf32, #tpu.memory_space<vmem>>, vector<8x8xf32>,
    %481 = vector.extract_strided_slice %439 {offsets = [24, 0], sizes = [8, 8], strides = [1, 1]} : vector<72x128xf32> to vector<8x8xf32>
    %c0_145 = arith.constant 0 : index
    %c56_146 = arith.constant 56 : index
    %482 = vector.load %arg4[%c0_145, %c56_146] : memref<8x128xf32, #tpu.memory_space<vmem>>, vector<8x8xf32>
    tpu.vector_store %arg4[%c0_145, %c56_146], %481 {strides = array<i32>} : memref<8x128xf32, #tpu.memory_space<vmem>>, vector<8x8xf32>,
    %483 = vector.extract_strided_slice %439 {offsets = [32, 0], sizes = [8, 8], strides = [1, 1]} : vector<72x128xf32> to vector<8x8xf32>
    %c0_147 = arith.constant 0 : index
    %c64_148 = arith.constant 64 : index
    %484 = vector.load %arg4[%c0_147, %c64_148] : memref<8x128xf32, #tpu.memory_space<vmem>>, vector<8x8xf32>
    tpu.vector_store %arg4[%c0_147, %c64_148], %483 {strides = array<i32>} : memref<8x128xf32, #tpu.memory_space<vmem>>, vector<8x8xf32>,
    %485 = vector.extract_strided_slice %439 {offsets = [40, 0], sizes = [8, 8], strides = [1, 1]} : vector<72x128xf32> to vector<8x8xf32>
    %c0_149 = arith.constant 0 : index
    %c72 = arith.constant 72 : index
    %486 = vector.load %arg4[%c0_149, %c72] : memref<8x128xf32, #tpu.memory_space<vmem>>, vector<8x8xf32>
    tpu.vector_store %arg4[%c0_149, %c72], %485 {strides = array<i32>} : memref<8x128xf32, #tpu.memory_space<vmem>>, vector<8x8xf32>,
    %487 = vector.extract_strided_slice %439 {offsets = [48, 0], sizes = [8, 8], strides = [1, 1]} : vector<72x128xf32> to vector<8x8xf32>
    %c0_150 = arith.constant 0 : index
    %c80 = arith.constant 80 : index
    %488 = vector.load %arg4[%c0_150, %c80] : memref<8x128xf32, #tpu.memory_space<vmem>>, vector<8x8xf32>
    tpu.vector_store %arg4[%c0_150, %c80], %487 {strides = array<i32>} : memref<8x128xf32, #tpu.memory_space<vmem>>, vector<8x8xf32>,
    %489 = vector.extract_strided_slice %439 {offsets = [56, 0], sizes = [8, 8], strides = [1, 1]} : vector<72x128xf32> to vector<8x8xf32>
    %c0_151 = arith.constant 0 : index
    %c88 = arith.constant 88 : index
    %490 = vector.load %arg4[%c0_151, %c88] : memref<8x128xf32, #tpu.memory_space<vmem>>, vector<8x8xf32>
    tpu.vector_store %arg4[%c0_151, %c88], %489 {strides = array<i32>} : memref<8x128xf32, #tpu.memory_space<vmem>>, vector<8x8xf32>,
    %c0_152 = arith.constant 0 : index
    %c96_153 = arith.constant 96 : index
    %491 = vector.load %arg4[%c0_152, %c96_153] : memref<8x128xf32, #tpu.memory_space<vmem>>, vector<8x4xf32>
    tpu.vector_store %arg4[%c0_152, %c96_153], %440 {strides = array<i32>} : memref<8x128xf32, #tpu.memory_space<vmem>>, vector<8x4xf32>,
    %c0_154 = arith.constant 0 : index
    %c100 = arith.constant 100 : index
    %492 = vector.load %arg4[%c0_154, %c100] : memref<8x128xf32, #tpu.memory_space<vmem>>, vector<8x1xf32>
    tpu.vector_store %arg4[%c0_154, %c100], %471 {strides = array<i32>} : memref<8x128xf32, #tpu.memory_space<vmem>>, vector<8x1xf32>,
    return
  }
  func.func @transform_0(%arg0: i32) -> (i32, i32, i32) {
    %c0_i32 = arith.constant 0 : i32
    %c0_i32_0 = arith.constant 0 : i32
    %c0_i32_1 = arith.constant 0 : i32
    return %c0_i32, %arg0, %c0_i32_0 : i32, i32, i32
  }
  func.func @transform_1(%arg0: i32) -> (i32, i32) {
    %c0_i32 = arith.constant 0 : i32
    %c0_i32_0 = arith.constant 0 : i32
    return %arg0, %c0_i32 : i32, i32
  }
  func.func @transform_2(%arg0: i32) -> (i32, i32) {
    %c0_i32 = arith.constant 0 : i32
    %c0_i32_0 = arith.constant 0 : i32
    %c0_i32_1 = arith.constant 0 : i32
    return %c0_i32, %c0_i32_0 : i32, i32
  }
  func.func @transform_3(%arg0: i32) -> (i32, i32) {
    %c0_i32 = arith.constant 0 : i32
    %c0_i32_0 = arith.constant 0 : i32
    return %arg0, %c0_i32 : i32, i32
  }
}

</mosaic_0001>

<llo_original>
// kernel: model2_outcome_logistic_regression.1
$region0: #{model2_outcome_logistic_regression.1}
  #allocation0 [shape = 'u32[]', space=smem, size = 0x4, offset = 0x4, fixed_abs, tag = 'smem constant byte address 0x4 - core index']
  #allocation1 [shape = 'u32[144,128]{1,0:T(1,128)}', space=vmem, size = 0x12000, scoped, tag = 'internal scratch']
  %s0 = inlined_call_operand.vmem [shape: f32[8,8,8], index: 0, kind: input, shape index: {}]
  %s1 = inlined_call_operand.vmem [shape: f32[8,6], index: 1, kind: input, shape index: {}]
  %s2 = inlined_call_operand.hbm [shape: f32[136,128], index: 2, kind: input, shape index: {}]
  %s3 = inlined_call_operand.vmem [shape: f32[8,128], index: 3, kind: output, shape index: {}]
  %s4 = sld [smem:[#allocation0]]
  $region26: #{model2_outcome_logistic_regression.1} parent=0
    _
  %s6 = ssub.s32 1, %s4
  %s7 = scalar_select 0, %s6, %s4
  $region1: #{model2_outcome_logistic_regression.1} parent=0
    #allocation2 [shape = 'u8[69632]{0}', space=vmem, size = 0x11000, scoped, tag = 'input window, operand 2, single buffered']
    #allocation3 [shape = 's32[1]{0}', space=sflag, size = 0x4, scoped, tag = 'scoped memory for model2_outcome_logistic_regression.1']
    %8 = vsyncpa [#allocation3], 0
    // Predicated region
    $region2: #{model2_outcome_logistic_regression.1} parent=1 // pred_check
      _
    $region3: #{model2_outcome_logistic_regression.1} parent=1 // pred_check_branch
      %10 = sbr.rel (0) target = $region5
    $region4: #{model2_outcome_logistic_regression.1} parent=1 // pred_region
      _
    $region5: #{model2_outcome_logistic_regression.1} parent=1 // pred_fallthru
      _
    // Predicated region
    $region6: #{model2_outcome_logistic_regression.1} parent=1 // pred_check
      _
    $region7: #{model2_outcome_logistic_regression.1} parent=1 // pred_check_branch
      %12 = sbr.rel (0) target = $region9
    $region8: #{model2_outcome_logistic_regression.1} parent=1 // pred_region
      _
    $region9: #{model2_outcome_logistic_regression.1} parent=1 // pred_fallthru
      _
    // Predicated region
    $region10: #{model2_outcome_logistic_regression.1} parent=1 // pred_check
      _
    $region11: #{model2_outcome_logistic_regression.1} parent=1 // pred_check_branch
      %14 = sbr.rel (0) target = $region13
    $region12: #{model2_outcome_logistic_regression.1} parent=1 // pred_region
      %s16 = ssub.s32 2176, 2176
      %17 = vsyncadd [#allocation3], %s16
      %s18 = sshll.u32 [#allocation2], 4
      %s19 = int_to_ptr.vmem [resolvable:$true] %s18
      %24 = dma.hbm_to_vmem [thread:$0]  %s2, 2176, %s19, [#allocation3], 128, 128, 8
    $region13: #{model2_outcome_logistic_regression.1} parent=1 // pred_fallthru
      _
    // Predicated region
    $region14: #{model2_outcome_logistic_regression.1} parent=1 // pred_check
      _
    $region15: #{model2_outcome_logistic_regression.1} parent=1 // pred_check_branch
      %26 = sbr.rel (0) target = $region17
    $region16: #{model2_outcome_logistic_regression.1} parent=1 // pred_region
      %27 = dma.done [#allocation3], 2176
    $region17: #{model2_outcome_logistic_regression.1} parent=1 // pred_fallthru
      _
    %v29 = vld [vmem:[#allocation2] sm:$0xff]
    %v30 = vld [vmem:[#allocation2 + $0x8] sm:$0x1]
    %v31 = vld [vmem:[#allocation2 + $0x10] sm:$0xff]
    %v32 = vld [vmem:[#allocation2 + $0x18] sm:$0xff]
    %v33 = vld [vmem:[#allocation2 + $0x20] sm:$0xff]
    %v34 = vld [vmem:[#allocation2 + $0x28] sm:$0xff]
    %v35 = vpack.c.bf16 %v32, %v31
    %v36 = vpack.c.bf16 %v34, %v33
    %v37 = vld [vmem:[#allocation2 + $0x30] sm:$0xff]
    %v38 = vld [vmem:[#allocation2 + $0x38] sm:$0x1]
    %v39 = vld [vmem:[#allocation2 + $0x40] sm:$0xff]
    %v40 = vld [vmem:[#allocation2 + $0x48] sm:$0xff]
    %v41 = vld [vmem:[#allocation2 + $0x50] sm:$0xff]
    %v42 = vld [vmem:[#allocation2 + $0x58] sm:$0xff]
    %v43 = vpack.c.bf16 %v40, %v39
    %v44 = vpack.c.bf16 %v42, %v41
    %v45 = vld [vmem:[#allocation2 + $0x60] sm:$0xff]
    %v46 = vld [vmem:[#allocation2 + $0x68] sm:$0xff]
    %v47 = vld [vmem:[#allocation2 + $0x70] sm:$0xff]
    %v48 = vld [vmem:[#allocation2 + $0x78] sm:$0xff]
    %v49 = vld [vmem:[#allocation2 + $0x80] sm:$0x1]
    %v50 = vld [vmem:[%s0] sm:$0xff]
    %v51 = vld [vmem:[%s0 + $0x8] sm:$0xff]
    %v52 = vld [vmem:[%s0 + $0x10] sm:$0xff]
    %v53 = vld [vmem:[%s0 + $0x18] sm:$0xff]
    %v54 = vld [vmem:[%s0 + $0x20] sm:$0xff]
    %v55 = vld [vmem:[%s0 + $0x28] sm:$0xff]
    %v56 = vld [vmem:[%s0 + $0x30] sm:$0xff]
    %v57 = vld [vmem:[%s0 + $0x38] sm:$0xff]
    %v58 = vlaneseq
    %v59 = vshrl.u32 %v58, 7
    %v60 = vsub.s32 0, %v59
    %v61 = vrot.slane %v30, %v60
    %vm62 = vcmask 64512
    %v64 = vsel %vm62, %v50, 0
    %v67 = vsel %vm62, %v51, 0
    %v70 = vsel %vm62, %v52, 0
    %v73 = vsel %vm62, %v53, 0
    %v76 = vsel %vm62, %v54, 0
    %v79 = vsel %vm62, %v55, 0
    %v82 = vsel %vm62, %v56, 0
    %v85 = vsel %vm62, %v57, 0
    %87 = vmatprep.subr.mxu0 0.0
    %88 = vmatpush1.msra.mxu0 0.0
    %89 = vmatprep.subr.mxu0 0.0
    %90 = vmatpush1.msra.mxu0 0.0
    %91 = vmatprep.subr.mxu0 0.0
    %92 = vmatpush1.msra.mxu0 0.0
    %93 = vmatprep.subr.mxu0 0.0
    %94 = vmatpush1.msra.mxu0 0.0
    %95 = vmatprep.subr.mxu0 0.0
    %96 = vmatpush1.msra.mxu0 0.0
    %97 = vmatprep.subr.mxu0 0.0
    %98 = vmatpush1.msra.mxu0 0.0
    %99 = vmatprep.subr.mxu0 0.0
    %100 = vmatpush1.msra.mxu0 0.0
    %101 = vmatprep.subr.mxu0 0.0
    %102 = vmatpush1.msra.mxu0 0.0
    %103 = vmatprep.subr.mxu0 0.0
    %104 = vmatpush1.msra.mxu0 0.0
    %105 = vmatprep.subr.mxu0 0.0
    %106 = vmatpush1.msra.mxu0 0.0
    %107 = vmatprep.subr.mxu0 0.0
    %108 = vmatpush1.msra.mxu0 0.0
    %109 = vmatprep.subr.mxu0 0.0
    %110 = vmatpush1.msra.mxu0 0.0
    %111 = vmatprep.subr.mxu0 0.0
    %112 = vmatpush1.msra.mxu0 0.0
    %113 = vmatprep.subr.mxu0 0.0
    %114 = vmatpush1.msra.mxu0 0.0
    %115 = vmatprep.subr.mxu0 0.0
    %116 = vmatpush1.msra.mxu0 0.0
    %117 = vmatprep.subr.mxu0 0.0
    %118 = vmatpush1.msra.mxu0 %v29
    %119 = vmatprep.subr.mxu0 0.0
    %120 = vmatpush2.msra.mxu0 0.0
    %121 = vmatprep.subr.mxu0 0.0
    %122 = vmatpush2.msra.mxu0 0.0
    %123 = vmatprep.subr.mxu0 0.0
    %124 = vmatpush2.msra.mxu0 0.0
    %125 = vmatprep.subr.mxu0 0.0
    %126 = vmatpush2.msra.mxu0 0.0
    %127 = vmatprep.subr.mxu0 0.0
    %128 = vmatpush2.msra.mxu0 0.0
    %129 = vmatprep.subr.mxu0 0.0
    %130 = vmatpush2.msra.mxu0 0.0
    %131 = vmatprep.subr.mxu0 0.0
    %132 = vmatpush2.msra.mxu0 0.0
    %133 = vmatprep.subr.mxu0 0.0
    %134 = vmatpush2.msra.mxu0 0.0
    %135 = vmatprep.subr.mxu0 0.0
    %136 = vmatpush2.msra.mxu0 0.0
    %137 = vmatprep.subr.mxu0 0.0
    %138 = vmatpush2.msra.mxu0 0.0
    %139 = vmatprep.subr.mxu0 0.0
    %140 = vmatpush2.msra.mxu0 0.0
    %141 = vmatprep.subr.mxu0 0.0
    %142 = vmatpush2.msra.mxu0 0.0
    %143 = vmatprep.subr.mxu0 0.0
    %144 = vmatpush2.msra.mxu0 0.0
    %145 = vmatprep.subr.mxu0 0.0
    %146 = vmatpush2.msra.mxu0 0.0
    %147 = vmatprep.subr.mxu0 0.0
    %148 = vmatpush2.msra.mxu0 0.0
    %149 = vmatprep.subr.mxu0 0.0
    %150 = vmatpush2.msra.mxu0 0.0
    %151 = vmatprep.mubr.f32.mxu0 0.0
    %152 = vmatmul.mubr.f32.gmra.mxu0 %v64
    %v153 = vpop.f32.mrf.mxu0
    %v154 = vadd.f32 %v61, %v153
    %v155 = vpop.f32.mrf.mxu0
    %156 = vmatprep.mubr.f32.mxu0 0.0
    %157 = vmatmul.mubr.f32.gmra.mxu0 %v67
    %v158 = vpop.f32.mrf.mxu0
    %v159 = vadd.f32 %v61, %v158
    %v160 = vpop.f32.mrf.mxu0
    %161 = vmatprep.mubr.f32.mxu0 0.0
    %162 = vmatmul.mubr.f32.gmra.mxu0 %v70
    %v163 = vpop.f32.mrf.mxu0
    %v164 = vadd.f32 %v61, %v163
    %v165 = vpop.f32.mrf.mxu0
    %166 = vmatprep.mubr.f32.mxu0 0.0
    %167 = vmatmul.mubr.f32.gmra.mxu0 %v73
    %v168 = vpop.f32.mrf.mxu0
    %v169 = vadd.f32 %v61, %v168
    %v170 = vpop.f32.mrf.mxu0
    %171 = vmatprep.mubr.f32.mxu0 0.0
    %172 = vmatmul.mubr.f32.gmra.mxu0 %v76
    %v173 = vpop.f32.mrf.mxu0
    %v174 = vadd.f32 %v61, %v173
    %v175 = vpop.f32.mrf.mxu0
    %176 = vmatprep.mubr.f32.mxu0 0.0
    %177 = vmatmul.mubr.f32.gmra.mxu0 %v79
    %v178 = vpop.f32.mrf.mxu0
    %v179 = vadd.f32 %v61, %v178
    %v180 = vpop.f32.mrf.mxu0
    %181 = vmatprep.mubr.f32.mxu0 0.0
    %182 = vmatmul.mubr.f32.gmra.mxu0 %v82
    %v183 = vpop.f32.mrf.mxu0
    %v184 = vadd.f32 %v61, %v183
    %v185 = vpop.f32.mrf.mxu0
    %186 = vmatprep.mubr.f32.mxu0 0.0
    %187 = vmatmul.mubr.f32.gmra.mxu0 %v85
    %v188 = vpop.f32.mrf.mxu0
    %v189 = vadd.f32 %v61, %v188
    %v190 = vpop.f32.mrf.mxu0
    %191 = vdwg.mxu0
    %v192 = vlaneseq
    %v193 = vshrl.u32 %v192, 7
    %v194 = vsub.s32 0, %v193
    %v195 = vrot.slane %v38, %v194
    %196 = vmatprep.subr.mxu0 0.0
    %197 = vmatpush1.msra.mxu0 0.0
    %198 = vmatprep.subr.mxu0 0.0
    %199 = vmatpush1.msra.mxu0 0.0
    %200 = vmatprep.subr.mxu0 0.0
    %201 = vmatpush1.msra.mxu0 0.0
    %202 = vmatprep.subr.mxu0 0.0
    %203 = vmatpush1.msra.mxu0 0.0
    %204 = vmatprep.subr.mxu0 0.0
    %205 = vmatpush1.msra.mxu0 0.0
    %206 = vmatprep.subr.mxu0 0.0
    %207 = vmatpush1.msra.mxu0 0.0
    %208 = vmatprep.subr.mxu0 0.0
    %209 = vmatpush1.msra.mxu0 0.0
    %210 = vmatprep.subr.mxu0 0.0
    %211 = vmatpush1.msra.mxu0 0.0
    %212 = vmatprep.subr.mxu0 0.0
    %213 = vmatpush1.msra.mxu0 0.0
    %214 = vmatprep.subr.mxu0 0.0
    %215 = vmatpush1.msra.mxu0 0.0
    %216 = vmatprep.subr.mxu0 0.0
    %217 = vmatpush1.msra.mxu0 0.0
    %218 = vmatprep.subr.mxu0 0.0
    %219 = vmatpush1.msra.mxu0 0.0
    %220 = vmatprep.subr.mxu0 0.0
    %221 = vmatpush1.msra.mxu0 0.0
    %222 = vmatprep.subr.mxu0 0.0
    %223 = vmatpush1.msra.mxu0 0.0
    %224 = vmatprep.subr.mxu0 0.0
    %225 = vmatpush1.msra.mxu0 0.0
    %226 = vmatprep.subr.mxu0 0.0
    %227 = vmatpush1.msra.mxu0 %v37
    %228 = vmatprep.subr.mxu0 0.0
    %229 = vmatpush2.msra.mxu0 0.0
    %230 = vmatprep.subr.mxu0 0.0
    %231 = vmatpush2.msra.mxu0 0.0
    %232 = vmatprep.subr.mxu0 0.0
    %233 = vmatpush2.msra.mxu0 0.0
    %234 = vmatprep.subr.mxu0 0.0
    %235 = vmatpush2.msra.mxu0 0.0
    %236 = vmatprep.subr.mxu0 0.0
    %237 = vmatpush2.msra.mxu0 0.0
    %238 = vmatprep.subr.mxu0 0.0
    %239 = vmatpush2.msra.mxu0 0.0
    %240 = vmatprep.subr.mxu0 0.0
    %241 = vmatpush2.msra.mxu0 0.0
    %242 = vmatprep.subr.mxu0 0.0
    %243 = vmatpush2.msra.mxu0 0.0
    %244 = vmatprep.subr.mxu0 0.0
    %245 = vmatpush2.msra.mxu0 0.0
    %246 = vmatprep.subr.mxu0 0.0
    %247 = vmatpush2.msra.mxu0 0.0
    %248 = vmatprep.subr.mxu0 0.0
    %249 = vmatpush2.msra.mxu0 0.0
    %250 = vmatprep.subr.mxu0 0.0
    %251 = vmatpush2.msra.mxu0 0.0
    %252 = vmatprep.subr.mxu0 0.0
    %253 = vmatpush2.msra.mxu0 0.0
    %254 = vmatprep.subr.mxu0 0.0
    %255 = vmatpush2.msra.mxu0 0.0
    %256 = vmatprep.subr.mxu0 0.0
    %257 = vmatpush2.msra.mxu0 0.0
    %258 = vmatprep.subr.mxu0 0.0
    %259 = vmatpush2.msra.mxu0 0.0
    %260 = vmatprep.mubr.f32.mxu0 0.0
    %261 = vmatmul.mubr.f32.gmra.mxu0 %v64
    %v262 = vpop.f32.mrf.mxu0
    %v263 = vpop.f32.mrf.mxu0
    %264 = vmatprep.mubr.f32.mxu0 0.0
    %265 = vmatmul.mubr.f32.gmra.mxu0 %v67
    %v266 = vpop.f32.mrf.mxu0
    %v267 = vadd.f32 %v195, %v266
    %v268 = vpop.f32.mrf.mxu0
    %269 = vmatprep.mubr.f32.mxu0 0.0
    %270 = vmatmul.mubr.f32.gmra.mxu0 %v70
    %v271 = vpop.f32.mrf.mxu0
    %v272 = vadd.f32 %v195, %v271
    %v273 = vpop.f32.mrf.mxu0
    %274 = vmatprep.mubr.f32.mxu0 0.0
    %275 = vmatmul.mubr.f32.gmra.mxu0 %v73
    %v276 = vpop.f32.mrf.mxu0
    %v277 = vadd.f32 %v195, %v276
    %v278 = vpop.f32.mrf.mxu0
    %279 = vmatprep.mubr.f32.mxu0 0.0
    %280 = vmatmul.mubr.f32.gmra.mxu0 %v76
    %v281 = vpop.f32.mrf.mxu0
    %v282 = vadd.f32 %v195, %v281
    %v283 = vpop.f32.mrf.mxu0
    %284 = vmatprep.mubr.f32.mxu0 0.0
    %285 = vmatmul.mubr.f32.gmra.mxu0 %v79
    %v286 = vpop.f32.mrf.mxu0
    %v287 = vadd.f32 %v195, %v286
    %v288 = vpop.f32.mrf.mxu0
    %289 = vmatprep.mubr.f32.mxu0 0.0
    %290 = vmatmul.mubr.f32.gmra.mxu0 %v82
    %v291 = vpop.f32.mrf.mxu0
    %v292 = vadd.f32 %v195, %v291
    %v293 = vpop.f32.mrf.mxu0
    %294 = vmatprep.mubr.f32.mxu0 0.0
    %295 = vmatmul.mubr.f32.gmra.mxu0 %v85
    %v296 = vpop.f32.mrf.mxu0
    %v297 = vadd.f32 %v195, %v296
    %v298 = vpop.f32.mrf.mxu0
    %299 = vdwg.mxu0
    %vm300 = vcmask 261120
    %v302 = vsel %vm300, 0, 0
    %304 = vmatprep.subr.bf16.mxu0 0
    %305 = vmatpush1.bf16.msra.mxu0 0
    %306 = vmatprep.subr.bf16.mxu0 0
    %307 = vmatpush1.bf16.msra.mxu0 0
    %308 = vmatprep.subr.bf16.mxu0 0
    %309 = vmatpush1.bf16.msra.mxu0 0
    %310 = vmatprep.subr.bf16.mxu0 0
    %311 = vmatpush1.bf16.msra.mxu0 0
    %312 = vmatprep.subr.bf16.mxu0 0
    %313 = vmatpush1.bf16.msra.mxu0 0
    %314 = vmatprep.subr.bf16.mxu0 0
    %315 = vmatpush1.bf16.msra.mxu0 0
    %316 = vmatprep.subr.bf16.mxu0 0
    %317 = vmatpush1.bf16.msra.mxu0 %v36
    %318 = vmatprep.subr.bf16.mxu0 0
    %319 = vmatpush1.bf16.msra.mxu0 %v35
    %320 = vmatprep.subr.bf16.mxu0 0
    %321 = vmatpush2.bf16.msra.mxu0 0
    %322 = vmatprep.subr.bf16.mxu0 0
    %323 = vmatpush2.bf16.msra.mxu0 0
    %324 = vmatprep.subr.bf16.mxu0 0
    %325 = vmatpush2.bf16.msra.mxu0 0
    %326 = vmatprep.subr.bf16.mxu0 0
    %327 = vmatpush2.bf16.msra.mxu0 0
    %328 = vmatprep.subr.bf16.mxu0 0
    %329 = vmatpush2.bf16.msra.mxu0 0
    %330 = vmatprep.subr.bf16.mxu0 0
    %331 = vmatpush2.bf16.msra.mxu0 0
    %332 = vmatprep.subr.bf16.mxu0 0
    %333 = vmatpush2.bf16.msra.mxu0 0
    %334 = vmatprep.subr.bf16.mxu0 0
    %335 = vmatpush2.bf16.msra.mxu0 0
    %336 = vmatprep.mubr.bf16.mxu0 0
    %337 = vmatmul.mubr.bf16.gmra.mxu0 %v302
    %v338 = vpop.f32.mrf.mxu0
    %v339 = vadd.f32 0.0, %v338
    %v340 = vpop.f32.mrf.mxu0
    %v341 = vpop.f32.mrf.mxu0
    %v342 = vpop.f32.mrf.mxu0
    %343 = vdwg.mxu0
    %v344 = vadd.f32 %v154, %v339
    %v345 = vtanh.pop %v344
    %v346 = vmul.f32 %v345, 0.5
    %v347 = vadd.f32 %v346, 0.5
    %v348 = vmul.f32 %v347, 0.0
    %350 = vrot.lane.b32.xlu0 %v345, 64
    %v351 = vpop.permute.xlu0 %350
    %v353 = vmul.f32 %v347, %v351
    %355 = vrot.lane.b32.xlu0 %v353, 32
    %v356 = vpop.permute.xlu0 %355
    %v358 = vadd.f32 %v348, %v356
    %v359 = vtanh.pop %v358
    %361 = vrot.lane.b32.xlu0 %v359, 64
    %v362 = vpop.permute.xlu0 %361
    %v364 = vmul.f32 %v347, %v362
    %v365 = vpack.c.bf16 %v364, %v364
    %367 = vrot.lane.b32.xlu0 %v365, 32
    %v368 = vpop.permute.xlu0 %367
    %v370 = vsel %vm300, %v368, 0
    %372 = vmatprep.subr.bf16.mxu0 0
    %373 = vmatpush1.bf16.msra.mxu0 0
    %374 = vmatprep.subr.bf16.mxu0 0
    %375 = vmatpush1.bf16.msra.mxu0 0
    %376 = vmatprep.subr.bf16.mxu0 0
    %377 = vmatpush1.bf16.msra.mxu0 0
    %378 = vmatprep.subr.bf16.mxu0 0
    %379 = vmatpush1.bf16.msra.mxu0 0
    %380 = vmatprep.subr.bf16.mxu0 0
    %381 = vmatpush1.bf16.msra.mxu0 0
    %382 = vmatprep.subr.bf16.mxu0 0
    %383 = vmatpush1.bf16.msra.mxu0 0
    %384 = vmatprep.subr.bf16.mxu0 0
    %385 = vmatpush1.bf16.msra.mxu0 %v36
    %386 = vmatprep.subr.bf16.mxu0 0
    %387 = vmatpush1.bf16.msra.mxu0 %v35
    %388 = vmatprep.subr.bf16.mxu0 0
    %389 = vmatpush2.bf16.msra.mxu0 0
    %390 = vmatprep.subr.bf16.mxu0 0
    %391 = vmatpush2.bf16.msra.mxu0 0
    %392 = vmatprep.subr.bf16.mxu0 0
    %393 = vmatpush2.bf16.msra.mxu0 0
    %394 = vmatprep.subr.bf16.mxu0 0
    %395 = vmatpush2.bf16.msra.mxu0 0
    %396 = vmatprep.subr.bf16.mxu0 0
    %397 = vmatpush2.bf16.msra.mxu0 0
    %398 = vmatprep.subr.bf16.mxu0 0
    %399 = vmatpush2.bf16.msra.mxu0 0
    %400 = vmatprep.subr.bf16.mxu0 0
    %401 = vmatpush2.bf16.msra.mxu0 0
    %402 = vmatprep.subr.bf16.mxu0 0
    %403 = vmatpush2.bf16.msra.mxu0 0
    %404 = vmatprep.mubr.bf16.mxu0 0
    %405 = vmatmul.mubr.bf16.gmra.mxu0 %v370
    %v406 = vpop.f32.mrf.mxu0
    %v407 = vadd.f32 0.0, %v406
    %v408 = vpop.f32.mrf.mxu0
    %v409 = vpop.f32.mrf.mxu0
    %v410 = vpop.f32.mrf.mxu0
    %411 = vdwg.mxu0
    %v412 = vadd.f32 %v159, %v407
    %v413 = vtanh.pop %v412
    %v414 = vmul.f32 %v413, 0.5
    %v415 = vadd.f32 %v414, 0.5
    %v416 = vmul.f32 %v415, %v358
    %418 = vrot.lane.b32.xlu0 %v413, 64
    %v419 = vpop.permute.xlu0 %418
    %v421 = vmul.f32 %v415, %v419
    %423 = vrot.lane.b32.xlu0 %v421, 32
    %v424 = vpop.permute.xlu0 %423
    %v426 = vadd.f32 %v416, %v424
    %v427 = vtanh.pop %v426
    %429 = vrot.lane.b32.xlu0 %v427, 64
    %v430 = vpop.permute.xlu0 %429
    %v432 = vmul.f32 %v415, %v430
    %v433 = vpack.c.bf16 %v432, %v432
    %435 = vrot.lane.b32.xlu0 %v433, 32
    %v436 = vpop.permute.xlu0 %435
    %v438 = vsel %vm300, %v436, 0
    %440 = vmatprep.subr.bf16.mxu0 0
    %441 = vmatpush1.bf16.msra.mxu0 0
    %442 = vmatprep.subr.bf16.mxu0 0
    %443 = vmatpush1.bf16.msra.mxu0 0
    %444 = vmatprep.subr.bf16.mxu0 0
    %445 = vmatpush1.bf16.msra.mxu0 0
    %446 = vmatprep.subr.bf16.mxu0 0
    %447 = vmatpush1.bf16.msra.mxu0 0
    %448 = vmatprep.subr.bf16.mxu0 0
    %449 = vmatpush1.bf16.msra.mxu0 0
    %450 = vmatprep.subr.bf16.mxu0 0
    %451 = vmatpush1.bf16.msra.mxu0 0
    %452 = vmatprep.subr.bf16.mxu0 0
    %453 = vmatpush1.bf16.msra.mxu0 %v36
    %454 = vmatprep.subr.bf16.mxu0 0
    %455 = vmatpush1.bf16.msra.mxu0 %v35
    %456 = vmatprep.subr.bf16.mxu0 0
    %457 = vmatpush2.bf16.msra.mxu0 0
    %458 = vmatprep.subr.bf16.mxu0 0
    %459 = vmatpush2.bf16.msra.mxu0 0
    %460 = vmatprep.subr.bf16.mxu0 0
    %461 = vmatpush2.bf16.msra.mxu0 0
    %462 = vmatprep.subr.bf16.mxu0 0
    %463 = vmatpush2.bf16.msra.mxu0 0
    %464 = vmatprep.subr.bf16.mxu0 0
    %465 = vmatpush2.bf16.msra.mxu0 0
    %466 = vmatprep.subr.bf16.mxu0 0
    %467 = vmatpush2.bf16.msra.mxu0 0
    %468 = vmatprep.subr.bf16.mxu0 0
    %469 = vmatpush2.bf16.msra.mxu0 0
    %470 = vmatprep.subr.bf16.mxu0 0
    %471 = vmatpush2.bf16.msra.mxu0 0
    %472 = vmatprep.mubr.bf16.mxu0 0
    %473 = vmatmul.mubr.bf16.gmra.mxu0 %v438
    %v474 = vpop.f32.mrf.mxu0
    %v475 = vadd.f32 0.0, %v474
    %v476 = vpop.f32.mrf.mxu0
    %v477 = vpop.f32.mrf.mxu0
    %v478 = vpop.f32.mrf.mxu0
    %479 = vdwg.mxu0
    %v480 = vadd.f32 %v164, %v475
    %v481 = vtanh.pop %v480
    %v482 = vmul.f32 %v481, 0.5
    %v483 = vadd.f32 %v482, 0.5
    %v484 = vmul.f32 %v483, %v426
    %486 = vrot.lane.b32.xlu0 %v481, 64
    %v487 = vpop.permute.xlu0 %486
    %v489 = vmul.f32 %v483, %v487
    %491 = vrot.lane.b32.xlu0 %v489, 32
    %v492 = vpop.permute.xlu0 %491
    %v494 = vadd.f32 %v484, %v492
    %v495 = vtanh.pop %v494
    %497 = vrot.lane.b32.xlu0 %v495, 64
    %v498 = vpop.permute.xlu0 %497
    %v500 = vmul.f32 %v483, %v498
    %v501 = vpack.c.bf16 %v500, %v500
    %503 = vrot.lane.b32.xlu0 %v501, 32
    %v504 = vpop.permute.xlu0 %503
    %v506 = vsel %vm300, %v504, 0
    %508 = vmatprep.subr.bf16.mxu0 0
    %509 = vmatpush1.bf16.msra.mxu0 0
    %510 = vmatprep.subr.bf16.mxu0 0
    %511 = vmatpush1.bf16.msra.mxu0 0
    %512 = vmatprep.subr.bf16.mxu0 0
    %513 = vmatpush1.bf16.msra.mxu0 0
    %514 = vmatprep.subr.bf16.mxu0 0
    %515 = vmatpush1.bf16.msra.mxu0 0
    %516 = vmatprep.subr.bf16.mxu0 0
    %517 = vmatpush1.bf16.msra.mxu0 0
    %518 = vmatprep.subr.bf16.mxu0 0
    %519 = vmatpush1.bf16.msra.mxu0 0
    %520 = vmatprep.subr.bf16.mxu0 0
    %521 = vmatpush1.bf16.msra.mxu0 %v36
    %522 = vmatprep.subr.bf16.mxu0 0
    %523 = vmatpush1.bf16.msra.mxu0 %v35
    %524 = vmatprep.subr.bf16.mxu0 0
    %525 = vmatpush2.bf16.msra.mxu0 0
    %526 = vmatprep.subr.bf16.mxu0 0
    %527 = vmatpush2.bf16.msra.mxu0 0
    %528 = vmatprep.subr.bf16.mxu0 0
    %529 = vmatpush2.bf16.msra.mxu0 0
    %530 = vmatprep.subr.bf16.mxu0 0
    %531 = vmatpush2.bf16.msra.mxu0 0
    %532 = vmatprep.subr.bf16.mxu0 0
    %533 = vmatpush2.bf16.msra.mxu0 0
    %534 = vmatprep.subr.bf16.mxu0 0
    %535 = vmatpush2.bf16.msra.mxu0 0
    %536 = vmatprep.subr.bf16.mxu0 0
    %537 = vmatpush2.bf16.msra.mxu0 0
    %538 = vmatprep.subr.bf16.mxu0 0
    %539 = vmatpush2.bf16.msra.mxu0 0
    %540 = vmatprep.mubr.bf16.mxu0 0
    %541 = vmatmul.mubr.bf16.gmra.mxu0 %v506
    %v542 = vpop.f32.mrf.mxu0
    %v543 = vadd.f32 0.0, %v542
    %v544 = vpop.f32.mrf.mxu0
    %v545 = vpop.f32.mrf.mxu0
    %v546 = vpop.f32.mrf.mxu0
    %547 = vdwg.mxu0
    %v548 = vadd.f32 %v169, %v543
    %v549 = vtanh.pop %v548
    %v550 = vmul.f32 %v549, 0.5
    %v551 = vadd.f32 %v550, 0.5
    %v552 = vmul.f32 %v551, %v494
    %554 = vrot.lane.b32.xlu0 %v549, 64
    %v555 = vpop.permute.xlu0 %554
    %v557 = vmul.f32 %v551, %v555
    %559 = vrot.lane.b32.xlu0 %v557, 32
    %v560 = vpop.permute.xlu0 %559
    %v562 = vadd.f32 %v552, %v560
    %v563 = vtanh.pop %v562
    %565 = vrot.lane.b32.xlu0 %v563, 64
    %v566 = vpop.permute.xlu0 %565
    %v568 = vmul.f32 %v551, %v566
    %v569 = vpack.c.bf16 %v568, %v568
    %571 = vrot.lane.b32.xlu0 %v569, 32
    %v572 = vpop.permute.xlu0 %571
    %v574 = vsel %vm300, %v572, 0
    %576 = vmatprep.subr.bf16.mxu0 0
    %577 = vmatpush1.bf16.msra.mxu0 0
    %578 = vmatprep.subr.bf16.mxu0 0
    %579 = vmatpush1.bf16.msra.mxu0 0
    %580 = vmatprep.subr.bf16.mxu0 0
    %581 = vmatpush1.bf16.msra.mxu0 0
    %582 = vmatprep.subr.bf16.mxu0 0
    %583 = vmatpush1.bf16.msra.mxu0 0
    %584 = vmatprep.subr.bf16.mxu0 0
    %585 = vmatpush1.bf16.msra.mxu0 0
    %586 = vmatprep.subr.bf16.mxu0 0
    %587 = vmatpush1.bf16.msra.mxu0 0
    %588 = vmatprep.subr.bf16.mxu0 0
    %589 = vmatpush1.bf16.msra.mxu0 %v36
    %590 = vmatprep.subr.bf16.mxu0 0
    %591 = vmatpush1.bf16.msra.mxu0 %v35
    %592 = vmatprep.subr.bf16.mxu0 0
    %593 = vmatpush2.bf16.msra.mxu0 0
    %594 = vmatprep.subr.bf16.mxu0 0
    %595 = vmatpush2.bf16.msra.mxu0 0
    %596 = vmatprep.subr.bf16.mxu0 0
    %597 = vmatpush2.bf16.msra.mxu0 0
    %598 = vmatprep.subr.bf16.mxu0 0
    %599 = vmatpush2.bf16.msra.mxu0 0
    %600 = vmatprep.subr.bf16.mxu0 0
    %601 = vmatpush2.bf16.msra.mxu0 0
    %602 = vmatprep.subr.bf16.mxu0 0
    %603 = vmatpush2.bf16.msra.mxu0 0
    %604 = vmatprep.subr.bf16.mxu0 0
    %605 = vmatpush2.bf16.msra.mxu0 0
    %606 = vmatprep.subr.bf16.mxu0 0
    %607 = vmatpush2.bf16.msra.mxu0 0
    %608 = vmatprep.mubr.bf16.mxu0 0
    %609 = vmatmul.mubr.bf16.gmra.mxu0 %v574
    %v610 = vpop.f32.mrf.mxu0
    %v611 = vadd.f32 0.0, %v610
    %v612 = vpop.f32.mrf.mxu0
    %v613 = vpop.f32.mrf.mxu0
    %v614 = vpop.f32.mrf.mxu0
    %615 = vdwg.mxu0
    %v616 = vadd.f32 %v174, %v611
    %v617 = vtanh.pop %v616
    %v618 = vmul.f32 %v617, 0.5
    %v619 = vadd.f32 %v618, 0.5
    %v620 = vmul.f32 %v619, %v562
    %622 = vrot.lane.b32.xlu0 %v617, 64
    %v623 = vpop.permute.xlu0 %622
    %v625 = vmul.f32 %v619, %v623
    %627 = vrot.lane.b32.xlu0 %v625, 32
    %v628 = vpop.permute.xlu0 %627
    %v630 = vadd.f32 %v620, %v628
    %v631 = vtanh.pop %v630
    %633 = vrot.lane.b32.xlu0 %v631, 64
    %v634 = vpop.permute.xlu0 %633
    %v636 = vmul.f32 %v619, %v634
    %v637 = vpack.c.bf16 %v636, %v636
    %639 = vrot.lane.b32.xlu0 %v637, 32
    %v640 = vpop.permute.xlu0 %639
    %v642 = vsel %vm300, %v640, 0
    %644 = vmatprep.subr.bf16.mxu0 0
    %645 = vmatpush1.bf16.msra.mxu0 0
    %646 = vmatprep.subr.bf16.mxu0 0
    %647 = vmatpush1.bf16.msra.mxu0 0
    %648 = vmatprep.subr.bf16.mxu0 0
    %649 = vmatpush1.bf16.msra.mxu0 0
    %650 = vmatprep.subr.bf16.mxu0 0
    %651 = vmatpush1.bf16.msra.mxu0 0
    %652 = vmatprep.subr.bf16.mxu0 0
    %653 = vmatpush1.bf16.msra.mxu0 0
    %654 = vmatprep.subr.bf16.mxu0 0
    %655 = vmatpush1.bf16.msra.mxu0 0
    %656 = vmatprep.subr.bf16.mxu0 0
    %657 = vmatpush1.bf16.msra.mxu0 %v36
    %658 = vmatprep.subr.bf16.mxu0 0
    %659 = vmatpush1.bf16.msra.mxu0 %v35
    %660 = vmatprep.subr.bf16.mxu0 0
    %661 = vmatpush2.bf16.msra.mxu0 0
    %662 = vmatprep.subr.bf16.mxu0 0
    %663 = vmatpush2.bf16.msra.mxu0 0
    %664 = vmatprep.subr.bf16.mxu0 0
    %665 = vmatpush2.bf16.msra.mxu0 0
    %666 = vmatprep.subr.bf16.mxu0 0
    %667 = vmatpush2.bf16.msra.mxu0 0
    %668 = vmatprep.subr.bf16.mxu0 0
    %669 = vmatpush2.bf16.msra.mxu0 0
    %670 = vmatprep.subr.bf16.mxu0 0
    %671 = vmatpush2.bf16.msra.mxu0 0
    %672 = vmatprep.subr.bf16.mxu0 0
    %673 = vmatpush2.bf16.msra.mxu0 0
    %674 = vmatprep.subr.bf16.mxu0 0
    %675 = vmatpush2.bf16.msra.mxu0 0
    %676 = vmatprep.mubr.bf16.mxu0 0
    %677 = vmatmul.mubr.bf16.gmra.mxu0 %v642
    %v678 = vpop.f32.mrf.mxu0
    %v679 = vadd.f32 0.0, %v678
    %v680 = vpop.f32.mrf.mxu0
    %v681 = vpop.f32.mrf.mxu0
    %v682 = vpop.f32.mrf.mxu0
    %683 = vdwg.mxu0
    %v684 = vadd.f32 %v179, %v679
    %v685 = vtanh.pop %v684
    %v686 = vmul.f32 %v685, 0.5
    %v687 = vadd.f32 %v686, 0.5
    %v688 = vmul.f32 %v687, %v630
    %690 = vrot.lane.b32.xlu0 %v685, 64
    %v691 = vpop.permute.xlu0 %690
    %v693 = vmul.f32 %v687, %v691
    %695 = vrot.lane.b32.xlu0 %v693, 32
    %v696 = vpop.permute.xlu0 %695
    %v698 = vadd.f32 %v688, %v696
    %v699 = vtanh.pop %v698
    %701 = vrot.lane.b32.xlu0 %v699, 64
    %v702 = vpop.permute.xlu0 %701
    %v704 = vmul.f32 %v687, %v702
    %v705 = vpack.c.bf16 %v704, %v704
    %707 = vrot.lane.b32.xlu0 %v705, 32
    %v708 = vpop.permute.xlu0 %707
    %v710 = vsel %vm300, %v708, 0
    %712 = vmatprep.subr.bf16.mxu0 0
    %713 = vmatpush1.bf16.msra.mxu0 0
    %714 = vmatprep.subr.bf16.mxu0 0
    %715 = vmatpush1.bf16.msra.mxu0 0
    %716 = vmatprep.subr.bf16.mxu0 0
    %717 = vmatpush1.bf16.msra.mxu0 0
    %718 = vmatprep.subr.bf16.mxu0 0
    %719 = vmatpush1.bf16.msra.mxu0 0
    %720 = vmatprep.subr.bf16.mxu0 0
    %721 = vmatpush1.bf16.msra.mxu0 0
    %722 = vmatprep.subr.bf16.mxu0 0
    %723 = vmatpush1.bf16.msra.mxu0 0
    %724 = vmatprep.subr.bf16.mxu0 0
    %725 = vmatpush1.bf16.msra.mxu0 %v36
    %726 = vmatprep.subr.bf16.mxu0 0
    %727 = vmatpush1.bf16.msra.mxu0 %v35
    %728 = vmatprep.subr.bf16.mxu0 0
    %729 = vmatpush2.bf16.msra.mxu0 0
    %730 = vmatprep.subr.bf16.mxu0 0
    %731 = vmatpush2.bf16.msra.mxu0 0
    %732 = vmatprep.subr.bf16.mxu0 0
    %733 = vmatpush2.bf16.msra.mxu0 0
    %734 = vmatprep.subr.bf16.mxu0 0
    %735 = vmatpush2.bf16.msra.mxu0 0
    %736 = vmatprep.subr.bf16.mxu0 0
    %737 = vmatpush2.bf16.msra.mxu0 0
    %738 = vmatprep.subr.bf16.mxu0 0
    %739 = vmatpush2.bf16.msra.mxu0 0
    %740 = vmatprep.subr.bf16.mxu0 0
    %741 = vmatpush2.bf16.msra.mxu0 0
    %742 = vmatprep.subr.bf16.mxu0 0
    %743 = vmatpush2.bf16.msra.mxu0 0
    %744 = vmatprep.mubr.bf16.mxu0 0
    %745 = vmatmul.mubr.bf16.gmra.mxu0 %v710
    %v746 = vpop.f32.mrf.mxu0
    %v747 = vadd.f32 0.0, %v746
    %v748 = vpop.f32.mrf.mxu0
    %v749 = vpop.f32.mrf.mxu0
    %v750 = vpop.f32.mrf.mxu0
    %751 = vdwg.mxu0
    %v752 = vadd.f32 %v184, %v747
    %v753 = vtanh.pop %v752
    %v754 = vmul.f32 %v753, 0.5
    %v755 = vadd.f32 %v754, 0.5
    %v756 = vmul.f32 %v755, %v698
    %758 = vrot.lane.b32.xlu0 %v753, 64
    %v759 = vpop.permute.xlu0 %758
    %v761 = vmul.f32 %v755, %v759
    %763 = vrot.lane.b32.xlu0 %v761, 32
    %v764 = vpop.permute.xlu0 %763
    %v766 = vadd.f32 %v756, %v764
    %v767 = vtanh.pop %v766
    %769 = vrot.lane.b32.xlu0 %v767, 64
    %v770 = vpop.permute.xlu0 %769
    %v772 = vmul.f32 %v755, %v770
    %v773 = vpack.c.bf16 %v772, %v772
    %775 = vrot.lane.b32.xlu0 %v773, 32
    %v776 = vpop.permute.xlu0 %775
    %v778 = vsel %vm300, %v776, 0
    %780 = vmatprep.subr.bf16.mxu0 0
    %781 = vmatpush1.bf16.msra.mxu0 0
    %782 = vmatprep.subr.bf16.mxu0 0
    %783 = vmatpush1.bf16.msra.mxu0 0
    %784 = vmatprep.subr.bf16.mxu0 0
    %785 = vmatpush1.bf16.msra.mxu0 0
    %786 = vmatprep.subr.bf16.mxu0 0
    %787 = vmatpush1.bf16.msra.mxu0 0
    %788 = vmatprep.subr.bf16.mxu0 0
    %789 = vmatpush1.bf16.msra.mxu0 0
    %790 = vmatprep.subr.bf16.mxu0 0
    %791 = vmatpush1.bf16.msra.mxu0 0
    %792 = vmatprep.subr.bf16.mxu0 0
    %793 = vmatpush1.bf16.msra.mxu0 %v36
    %794 = vmatprep.subr.bf16.mxu0 0
    %795 = vmatpush1.bf16.msra.mxu0 %v35
    %796 = vmatprep.subr.bf16.mxu0 0
    %797 = vmatpush2.bf16.msra.mxu0 0
    %798 = vmatprep.subr.bf16.mxu0 0
    %799 = vmatpush2.bf16.msra.mxu0 0
    %800 = vmatprep.subr.bf16.mxu0 0
    %801 = vmatpush2.bf16.msra.mxu0 0
    %802 = vmatprep.subr.bf16.mxu0 0
    %803 = vmatpush2.bf16.msra.mxu0 0
    %804 = vmatprep.subr.bf16.mxu0 0
    %805 = vmatpush2.bf16.msra.mxu0 0
    %806 = vmatprep.subr.bf16.mxu0 0
    %807 = vmatpush2.bf16.msra.mxu0 0
    %808 = vmatprep.subr.bf16.mxu0 0
    %809 = vmatpush2.bf16.msra.mxu0 0
    %810 = vmatprep.subr.bf16.mxu0 0
    %811 = vmatpush2.bf16.msra.mxu0 0
    %812 = vmatprep.mubr.bf16.mxu0 0
    %813 = vmatmul.mubr.bf16.gmra.mxu0 %v778
    %v814 = vpop.f32.mrf.mxu0
    %v815 = vadd.f32 0.0, %v814
    %v816 = vpop.f32.mrf.mxu0
    %v817 = vpop.f32.mrf.mxu0
    %v818 = vpop.f32.mrf.mxu0
    %819 = vdwg.mxu0
    %v820 = vadd.f32 %v189, %v815
    %v821 = vtanh.pop %v820
    %v822 = vmul.f32 %v821, 0.5
    %v823 = vadd.f32 %v822, 0.5
    %v824 = vmul.f32 %v823, %v766
    %826 = vrot.lane.b32.xlu0 %v821, 64
    %v827 = vpop.permute.xlu0 %826
    %v829 = vmul.f32 %v823, %v827
    %831 = vrot.lane.b32.xlu0 %v829, 32
    %v832 = vpop.permute.xlu0 %831
    %v834 = vadd.f32 %v824, %v832
    %v835 = vtanh.pop %v834
    %837 = vrot.lane.b32.xlu0 %v835, 64
    %v838 = vpop.permute.xlu0 %837
    %v840 = vmul.f32 %v823, %v838
    %v841 = vpack.c.bf16 %v840, %v840
    %843 = vrot.lane.b32.xlu0 %v841, 32
    %v844 = vpop.permute.xlu0 %843
    %v846 = vsel %vm300, %v844, 0
    %848 = vmatprep.subr.bf16.mxu0 0
    %849 = vmatpush1.bf16.msra.mxu0 0
    %850 = vmatprep.subr.bf16.mxu0 0
    %851 = vmatpush1.bf16.msra.mxu0 0
    %852 = vmatprep.subr.bf16.mxu0 0
    %853 = vmatpush1.bf16.msra.mxu0 0
    %854 = vmatprep.subr.bf16.mxu0 0
    %855 = vmatpush1.bf16.msra.mxu0 0
    %856 = vmatprep.subr.bf16.mxu0 0
    %857 = vmatpush1.bf16.msra.mxu0 0
    %858 = vmatprep.subr.bf16.mxu0 0
    %859 = vmatpush1.bf16.msra.mxu0 0
    %860 = vmatprep.subr.bf16.mxu0 0
    %861 = vmatpush1.bf16.msra.mxu0 %v44
    %862 = vmatprep.subr.bf16.mxu0 0
    %863 = vmatpush1.bf16.msra.mxu0 %v43
    %864 = vmatprep.subr.bf16.mxu0 0
    %865 = vmatpush2.bf16.msra.mxu0 0
    %866 = vmatprep.subr.bf16.mxu0 0
    %867 = vmatpush2.bf16.msra.mxu0 0
    %868 = vmatprep.subr.bf16.mxu0 0
    %869 = vmatpush2.bf16.msra.mxu0 0
    %870 = vmatprep.subr.bf16.mxu0 0
    %871 = vmatpush2.bf16.msra.mxu0 0
    %872 = vmatprep.subr.bf16.mxu0 0
    %873 = vmatpush2.bf16.msra.mxu0 0
    %874 = vmatprep.subr.bf16.mxu0 0
    %875 = vmatpush2.bf16.msra.mxu0 0
    %876 = vmatprep.subr.bf16.mxu0 0
    %877 = vmatpush2.bf16.msra.mxu0 0
    %878 = vmatprep.subr.bf16.mxu0 0
    %879 = vmatpush2.bf16.msra.mxu0 0
    %880 = vmatprep.mubr.bf16.mxu0 0
    %881 = vmatmul.mubr.bf16.gmra.mxu0 %v846
    %v882 = vpop.f32.mrf.mxu0
    %v883 = vadd.f32 0.0, %v882
    %v884 = vpop.f32.mrf.mxu0
    %v885 = vpop.f32.mrf.mxu0
    %v886 = vpop.f32.mrf.mxu0
    %887 = vdwg.mxu0
    %v888 = vadd.f32 %v195, %v883
    %v889 = vtanh.pop %v888
    %v890 = vmul.f32 %v889, 0.5
    %v891 = vadd.f32 %v890, 0.5
    %v892 = vmul.f32 %v891, %v834
    %894 = vrot.lane.b32.xlu0 %v889, 64
    %v895 = vpop.permute.xlu0 %894
    %v897 = vmul.f32 %v891, %v895
    %899 = vrot.lane.b32.xlu0 %v897, 32
    %v900 = vpop.permute.xlu0 %899
    %v902 = vadd.f32 %v892, %v900
    %v903 = vtanh.pop %v902
    %905 = vrot.lane.b32.xlu0 %v903, 64
    %v906 = vpop.permute.xlu0 %905
    %v908 = vmul.f32 %v891, %v906
    %v909 = vpack.c.bf16 %v908, %v908
    %911 = vrot.lane.b32.xlu0 %v909, 32
    %v912 = vpop.permute.xlu0 %911
    %v914 = vsel %vm300, %v912, 0
    %916 = vmatprep.subr.bf16.mxu0 0
    %917 = vmatpush1.bf16.msra.mxu0 0
    %918 = vmatprep.subr.bf16.mxu0 0
    %919 = vmatpush1.bf16.msra.mxu0 0
    %920 = vmatprep.subr.bf16.mxu0 0
    %921 = vmatpush1.bf16.msra.mxu0 0
    %922 = vmatprep.subr.bf16.mxu0 0
    %923 = vmatpush1.bf16.msra.mxu0 0
    %924 = vmatprep.subr.bf16.mxu0 0
    %925 = vmatpush1.bf16.msra.mxu0 0
    %926 = vmatprep.subr.bf16.mxu0 0
    %927 = vmatpush1.bf16.msra.mxu0 0
    %928 = vmatprep.subr.bf16.mxu0 0
    %929 = vmatpush1.bf16.msra.mxu0 %v44
    %930 = vmatprep.subr.bf16.mxu0 0
    %931 = vmatpush1.bf16.msra.mxu0 %v43
    %932 = vmatprep.subr.bf16.mxu0 0
    %933 = vmatpush2.bf16.msra.mxu0 0
    %934 = vmatprep.subr.bf16.mxu0 0
    %935 = vmatpush2.bf16.msra.mxu0 0
    %936 = vmatprep.subr.bf16.mxu0 0
    %937 = vmatpush2.bf16.msra.mxu0 0
    %938 = vmatprep.subr.bf16.mxu0 0
    %939 = vmatpush2.bf16.msra.mxu0 0
    %940 = vmatprep.subr.bf16.mxu0 0
    %941 = vmatpush2.bf16.msra.mxu0 0
    %942 = vmatprep.subr.bf16.mxu0 0
    %943 = vmatpush2.bf16.msra.mxu0 0
    %944 = vmatprep.subr.bf16.mxu0 0
    %945 = vmatpush2.bf16.msra.mxu0 0
    %946 = vmatprep.subr.bf16.mxu0 0
    %947 = vmatpush2.bf16.msra.mxu0 0
    %948 = vmatprep.mubr.bf16.mxu0 0
    %949 = vmatmul.mubr.bf16.gmra.mxu0 %v914
    %v950 = vpop.f32.mrf.mxu0
    %v951 = vadd.f32 0.0, %v950
    %v952 = vpop.f32.mrf.mxu0
    %v953 = vpop.f32.mrf.mxu0
    %v954 = vpop.f32.mrf.mxu0
    %955 = vdwg.mxu0
    %v956 = vadd.f32 %v297, %v951
    %v957 = vtanh.pop %v956
    %v958 = vmul.f32 %v957, 0.5
    %v959 = vadd.f32 %v958, 0.5
    %v960 = vmul.f32 %v959, %v902
    %962 = vrot.lane.b32.xlu0 %v957, 64
    %v963 = vpop.permute.xlu0 %962
    %v965 = vmul.f32 %v959, %v963
    %967 = vrot.lane.b32.xlu0 %v965, 32
    %v968 = vpop.permute.xlu0 %967
    %v970 = vadd.f32 %v960, %v968
    %v971 = vtanh.pop %v970
    %973 = vrot.lane.b32.xlu0 %v971, 64
    %v974 = vpop.permute.xlu0 %973
    %v976 = vmul.f32 %v959, %v974
    %v977 = vpack.c.bf16 %v976, %v976
    %979 = vrot.lane.b32.xlu0 %v977, 32
    %v980 = vpop.permute.xlu0 %979
    %v982 = vsel %vm300, %v980, 0
    %984 = vmatprep.subr.bf16.mxu0 0
    %985 = vmatpush1.bf16.msra.mxu0 0
    %986 = vmatprep.subr.bf16.mxu0 0
    %987 = vmatpush1.bf16.msra.mxu0 0
    %988 = vmatprep.subr.bf16.mxu0 0
    %989 = vmatpush1.bf16.msra.mxu0 0
    %990 = vmatprep.subr.bf16.mxu0 0
    %991 = vmatpush1.bf16.msra.mxu0 0
    %992 = vmatprep.subr.bf16.mxu0 0
    %993 = vmatpush1.bf16.msra.mxu0 0
    %994 = vmatprep.subr.bf16.mxu0 0
    %995 = vmatpush1.bf16.msra.mxu0 0
    %996 = vmatprep.subr.bf16.mxu0 0
    %997 = vmatpush1.bf16.msra.mxu0 %v44
    %998 = vmatprep.subr.bf16.mxu0 0
    %999 = vmatpush1.bf16.msra.mxu0 %v43
    %1000 = vmatprep.subr.bf16.mxu0 0
    %1001 = vmatpush2.bf16.msra.mxu0 0
    %1002 = vmatprep.subr.bf16.mxu0 0
    %1003 = vmatpush2.bf16.msra.mxu0 0
    %1004 = vmatprep.subr.bf16.mxu0 0
    %1005 = vmatpush2.bf16.msra.mxu0 0
    %1006 = vmatprep.subr.bf16.mxu0 0
    %1007 = vmatpush2.bf16.msra.mxu0 0
    %1008 = vmatprep.subr.bf16.mxu0 0
    %1009 = vmatpush2.bf16.msra.mxu0 0
    %1010 = vmatprep.subr.bf16.mxu0 0
    %1011 = vmatpush2.bf16.msra.mxu0 0
    %1012 = vmatprep.subr.bf16.mxu0 0
    %1013 = vmatpush2.bf16.msra.mxu0 0
    %1014 = vmatprep.subr.bf16.mxu0 0
    %1015 = vmatpush2.bf16.msra.mxu0 0
    %1016 = vmatprep.mubr.bf16.mxu0 0
    %1017 = vmatmul.mubr.bf16.gmra.mxu0 %v982
    %v1018 = vpop.f32.mrf.mxu0
    %v1019 = vadd.f32 0.0, %v1018
    %v1020 = vpop.f32.mrf.mxu0
    %v1021 = vpop.f32.mrf.mxu0
    %v1022 = vpop.f32.mrf.mxu0
    %1023 = vdwg.mxu0
    %v1024 = vadd.f32 %v292, %v1019
    %v1025 = vtanh.pop %v1024
    %v1026 = vmul.f32 %v1025, 0.5
    %v1027 = vadd.f32 %v1026, 0.5
    %v1028 = vmul.f32 %v1027, %v970
    %1030 = vrot.lane.b32.xlu0 %v1025, 64
    %v1031 = vpop.permute.xlu0 %1030
    %v1033 = vmul.f32 %v1027, %v1031
    %1035 = vrot.lane.b32.xlu0 %v1033, 32
    %v1036 = vpop.permute.xlu0 %1035
    %v1038 = vadd.f32 %v1028, %v1036
    %v1039 = vtanh.pop %v1038
    %1041 = vrot.lane.b32.xlu0 %v1039, 64
    %v1042 = vpop.permute.xlu0 %1041
    %v1044 = vmul.f32 %v1027, %v1042
    %v1045 = vpack.c.bf16 %v1044, %v1044
    %1047 = vrot.lane.b32.xlu0 %v1045, 32
    %v1048 = vpop.permute.xlu0 %1047
    %v1050 = vsel %vm300, %v1048, 0
    %1052 = vmatprep.subr.bf16.mxu0 0
    %1053 = vmatpush1.bf16.msra.mxu0 0
    %1054 = vmatprep.subr.bf16.mxu0 0
    %1055 = vmatpush1.bf16.msra.mxu0 0
    %1056 = vmatprep.subr.bf16.mxu0 0
    %1057 = vmatpush1.bf16.msra.mxu0 0
    %1058 = vmatprep.subr.bf16.mxu0 0
    %1059 = vmatpush1.bf16.msra.mxu0 0
    %1060 = vmatprep.subr.bf16.mxu0 0
    %1061 = vmatpush1.bf16.msra.mxu0 0
    %1062 = vmatprep.subr.bf16.mxu0 0
    %1063 = vmatpush1.bf16.msra.mxu0 0
    %1064 = vmatprep.subr.bf16.mxu0 0
    %1065 = vmatpush1.bf16.msra.mxu0 %v44
    %1066 = vmatprep.subr.bf16.mxu0 0
    %1067 = vmatpush1.bf16.msra.mxu0 %v43
    %1068 = vmatprep.subr.bf16.mxu0 0
    %1069 = vmatpush2.bf16.msra.mxu0 0
    %1070 = vmatprep.subr.bf16.mxu0 0
    %1071 = vmatpush2.bf16.msra.mxu0 0
    %1072 = vmatprep.subr.bf16.mxu0 0
    %1073 = vmatpush2.bf16.msra.mxu0 0
    %1074 = vmatprep.subr.bf16.mxu0 0
    %1075 = vmatpush2.bf16.msra.mxu0 0
    %1076 = vmatprep.subr.bf16.mxu0 0
    %1077 = vmatpush2.bf16.msra.mxu0 0
    %1078 = vmatprep.subr.bf16.mxu0 0
    %1079 = vmatpush2.bf16.msra.mxu0 0
    %1080 = vmatprep.subr.bf16.mxu0 0
    %1081 = vmatpush2.bf16.msra.mxu0 0
    %1082 = vmatprep.subr.bf16.mxu0 0
    %1083 = vmatpush2.bf16.msra.mxu0 0
    %1084 = vmatprep.mubr.bf16.mxu0 0
    %1085 = vmatmul.mubr.bf16.gmra.mxu0 %v1050
    %v1086 = vpop.f32.mrf.mxu0
    %v1087 = vadd.f32 0.0, %v1086
    %v1088 = vpop.f32.mrf.mxu0
    %v1089 = vpop.f32.mrf.mxu0
    %v1090 = vpop.f32.mrf.mxu0
    %1091 = vdwg.mxu0
    %v1092 = vadd.f32 %v287, %v1087
    %v1093 = vtanh.pop %v1092
    %v1094 = vmul.f32 %v1093, 0.5
    %v1095 = vadd.f32 %v1094, 0.5
    %v1096 = vmul.f32 %v1095, %v1038
    %1098 = vrot.lane.b32.xlu0 %v1093, 64
    %v1099 = vpop.permute.xlu0 %1098
    %v1101 = vmul.f32 %v1095, %v1099
    %1103 = vrot.lane.b32.xlu0 %v1101, 32
    %v1104 = vpop.permute.xlu0 %1103
    %v1106 = vadd.f32 %v1096, %v1104
    %v1107 = vtanh.pop %v1106
    %1109 = vrot.lane.b32.xlu0 %v1107, 64
    %v1110 = vpop.permute.xlu0 %1109
    %v1112 = vmul.f32 %v1095, %v1110
    %v1113 = vpack.c.bf16 %v1112, %v1112
    %1115 = vrot.lane.b32.xlu0 %v1113, 32
    %v1116 = vpop.permute.xlu0 %1115
    %v1118 = vsel %vm300, %v1116, 0
    %1120 = vmatprep.subr.bf16.mxu0 0
    %1121 = vmatpush1.bf16.msra.mxu0 0
    %1122 = vmatprep.subr.bf16.mxu0 0
    %1123 = vmatpush1.bf16.msra.mxu0 0
    %1124 = vmatprep.subr.bf16.mxu0 0
    %1125 = vmatpush1.bf16.msra.mxu0 0
    %1126 = vmatprep.subr.bf16.mxu0 0
    %1127 = vmatpush1.bf16.msra.mxu0 0
    %1128 = vmatprep.subr.bf16.mxu0 0
    %1129 = vmatpush1.bf16.msra.mxu0 0
    %1130 = vmatprep.subr.bf16.mxu0 0
    %1131 = vmatpush1.bf16.msra.mxu0 0
    %1132 = vmatprep.subr.bf16.mxu0 0
    %1133 = vmatpush1.bf16.msra.mxu0 %v44
    %1134 = vmatprep.subr.bf16.mxu0 0
    %1135 = vmatpush1.bf16.msra.mxu0 %v43
    %1136 = vmatprep.subr.bf16.mxu0 0
    %1137 = vmatpush2.bf16.msra.mxu0 0
    %1138 = vmatprep.subr.bf16.mxu0 0
    %1139 = vmatpush2.bf16.msra.mxu0 0
    %1140 = vmatprep.subr.bf16.mxu0 0
    %1141 = vmatpush2.bf16.msra.mxu0 0
    %1142 = vmatprep.subr.bf16.mxu0 0
    %1143 = vmatpush2.bf16.msra.mxu0 0
    %1144 = vmatprep.subr.bf16.mxu0 0
    %1145 = vmatpush2.bf16.msra.mxu0 0
    %1146 = vmatprep.subr.bf16.mxu0 0
    %1147 = vmatpush2.bf16.msra.mxu0 0
    %1148 = vmatprep.subr.bf16.mxu0 0
    %1149 = vmatpush2.bf16.msra.mxu0 0
    %1150 = vmatprep.subr.bf16.mxu0 0
    %1151 = vmatpush2.bf16.msra.mxu0 0
    %1152 = vmatprep.mubr.bf16.mxu0 0
    %1153 = vmatmul.mubr.bf16.gmra.mxu0 %v1118
    %v1154 = vpop.f32.mrf.mxu0
    %v1155 = vadd.f32 0.0, %v1154
    %v1156 = vpop.f32.mrf.mxu0
    %v1157 = vpop.f32.mrf.mxu0
    %v1158 = vpop.f32.mrf.mxu0
    %1159 = vdwg.mxu0
    %v1160 = vadd.f32 %v282, %v1155
    %v1161 = vtanh.pop %v1160
    %v1162 = vmul.f32 %v1161, 0.5
    %v1163 = vadd.f32 %v1162, 0.5
    %v1164 = vmul.f32 %v1163, %v1106
    %1166 = vrot.lane.b32.xlu0 %v1161, 64
    %v1167 = vpop.permute.xlu0 %1166
    %v1169 = vmul.f32 %v1163, %v1167
    %1171 = vrot.lane.b32.xlu0 %v1169, 32
    %v1172 = vpop.permute.xlu0 %1171
    %v1174 = vadd.f32 %v1164, %v1172
    %v1175 = vtanh.pop %v1174
    %1177 = vrot.lane.b32.xlu0 %v1175, 64
    %v1178 = vpop.permute.xlu0 %1177
    %v1180 = vmul.f32 %v1163, %v1178
    %v1181 = vpack.c.bf16 %v1180, %v1180
    %1183 = vrot.lane.b32.xlu0 %v1181, 32
    %v1184 = vpop.permute.xlu0 %1183
    %v1186 = vsel %vm300, %v1184, 0
    %1188 = vmatprep.subr.bf16.mxu0 0
    %1189 = vmatpush1.bf16.msra.mxu0 0
    %1190 = vmatprep.subr.bf16.mxu0 0
    %1191 = vmatpush1.bf16.msra.mxu0 0
    %1192 = vmatprep.subr.bf16.mxu0 0
    %1193 = vmatpush1.bf16.msra.mxu0 0
    %1194 = vmatprep.subr.bf16.mxu0 0
    %1195 = vmatpush1.bf16.msra.mxu0 0
    %1196 = vmatprep.subr.bf16.mxu0 0
    %1197 = vmatpush1.bf16.msra.mxu0 0
    %1198 = vmatprep.subr.bf16.mxu0 0
    %1199 = vmatpush1.bf16.msra.mxu0 0
    %1200 = vmatprep.subr.bf16.mxu0 0
    %1201 = vmatpush1.bf16.msra.mxu0 %v44
    %1202 = vmatprep.subr.bf16.mxu0 0
    %1203 = vmatpush1.bf16.msra.mxu0 %v43
    %1204 = vmatprep.subr.bf16.mxu0 0
    %1205 = vmatpush2.bf16.msra.mxu0 0
    %1206 = vmatprep.subr.bf16.mxu0 0
    %1207 = vmatpush2.bf16.msra.mxu0 0
    %1208 = vmatprep.subr.bf16.mxu0 0
    %1209 = vmatpush2.bf16.msra.mxu0 0
    %1210 = vmatprep.subr.bf16.mxu0 0
    %1211 = vmatpush2.bf16.msra.mxu0 0
    %1212 = vmatprep.subr.bf16.mxu0 0
    %1213 = vmatpush2.bf16.msra.mxu0 0
    %1214 = vmatprep.subr.bf16.mxu0 0
    %1215 = vmatpush2.bf16.msra.mxu0 0
    %1216 = vmatprep.subr.bf16.mxu0 0
    %1217 = vmatpush2.bf16.msra.mxu0 0
    %1218 = vmatprep.subr.bf16.mxu0 0
    %1219 = vmatpush2.bf16.msra.mxu0 0
    %1220 = vmatprep.mubr.bf16.mxu0 0
    %1221 = vmatmul.mubr.bf16.gmra.mxu0 %v1186
    %v1222 = vpop.f32.mrf.mxu0
    %v1223 = vadd.f32 0.0, %v1222
    %v1224 = vpop.f32.mrf.mxu0
    %v1225 = vpop.f32.mrf.mxu0
    %v1226 = vpop.f32.mrf.mxu0
    %1227 = vdwg.mxu0
    %v1228 = vadd.f32 %v277, %v1223
    %v1229 = vtanh.pop %v1228
    %v1230 = vmul.f32 %v1229, 0.5
    %v1231 = vadd.f32 %v1230, 0.5
    %v1232 = vmul.f32 %v1231, %v1174
    %1234 = vrot.lane.b32.xlu0 %v1229, 64
    %v1235 = vpop.permute.xlu0 %1234
    %v1237 = vmul.f32 %v1231, %v1235
    %1239 = vrot.lane.b32.xlu0 %v1237, 32
    %v1240 = vpop.permute.xlu0 %1239
    %v1242 = vadd.f32 %v1232, %v1240
    %v1243 = vtanh.pop %v1242
    %1245 = vrot.lane.b32.xlu0 %v1243, 64
    %v1246 = vpop.permute.xlu0 %1245
    %v1248 = vmul.f32 %v1231, %v1246
    %v1249 = vpack.c.bf16 %v1248, %v1248
    %1251 = vrot.lane.b32.xlu0 %v1249, 32
    %v1252 = vpop.permute.xlu0 %1251
    %v1254 = vsel %vm300, %v1252, 0
    %1256 = vmatprep.subr.bf16.mxu0 0
    %1257 = vmatpush1.bf16.msra.mxu0 0
    %1258 = vmatprep.subr.bf16.mxu0 0
    %1259 = vmatpush1.bf16.msra.mxu0 0
    %1260 = vmatprep.subr.bf16.mxu0 0
    %1261 = vmatpush1.bf16.msra.mxu0 0
    %1262 = vmatprep.subr.bf16.mxu0 0
    %1263 = vmatpush1.bf16.msra.mxu0 0
    %1264 = vmatprep.subr.bf16.mxu0 0
    %1265 = vmatpush1.bf16.msra.mxu0 0
    %1266 = vmatprep.subr.bf16.mxu0 0
    %1267 = vmatpush1.bf16.msra.mxu0 0
    %1268 = vmatprep.subr.bf16.mxu0 0
    %1269 = vmatpush1.bf16.msra.mxu0 %v44
    %1270 = vmatprep.subr.bf16.mxu0 0
    %1271 = vmatpush1.bf16.msra.mxu0 %v43
    %1272 = vmatprep.subr.bf16.mxu0 0
    %1273 = vmatpush2.bf16.msra.mxu0 0
    %1274 = vmatprep.subr.bf16.mxu0 0
    %1275 = vmatpush2.bf16.msra.mxu0 0
    %1276 = vmatprep.subr.bf16.mxu0 0
    %1277 = vmatpush2.bf16.msra.mxu0 0
    %1278 = vmatprep.subr.bf16.mxu0 0
    %1279 = vmatpush2.bf16.msra.mxu0 0
    %1280 = vmatprep.subr.bf16.mxu0 0
    %1281 = vmatpush2.bf16.msra.mxu0 0
    %1282 = vmatprep.subr.bf16.mxu0 0
    %1283 = vmatpush2.bf16.msra.mxu0 0
    %1284 = vmatprep.subr.bf16.mxu0 0
    %1285 = vmatpush2.bf16.msra.mxu0 0
    %1286 = vmatprep.subr.bf16.mxu0 0
    %1287 = vmatpush2.bf16.msra.mxu0 0
    %1288 = vmatprep.mubr.bf16.mxu0 0
    %1289 = vmatmul.mubr.bf16.gmra.mxu0 %v1254
    %v1290 = vpop.f32.mrf.mxu0
    %v1291 = vadd.f32 0.0, %v1290
    %v1292 = vpop.f32.mrf.mxu0
    %v1293 = vpop.f32.mrf.mxu0
    %v1294 = vpop.f32.mrf.mxu0
    %1295 = vdwg.mxu0
    %v1296 = vadd.f32 %v272, %v1291
    %v1297 = vtanh.pop %v1296
    %v1298 = vmul.f32 %v1297, 0.5
    %v1299 = vadd.f32 %v1298, 0.5
    %v1300 = vmul.f32 %v1299, %v1242
    %1302 = vrot.lane.b32.xlu0 %v1297, 64
    %v1303 = vpop.permute.xlu0 %1302
    %v1305 = vmul.f32 %v1299, %v1303
    %1307 = vrot.lane.b32.xlu0 %v1305, 32
    %v1308 = vpop.permute.xlu0 %1307
    %v1310 = vadd.f32 %v1300, %v1308
    %v1311 = vtanh.pop %v1310
    %1313 = vrot.lane.b32.xlu0 %v1311, 64
    %v1314 = vpop.permute.xlu0 %1313
    %v1316 = vmul.f32 %v1299, %v1314
    %v1317 = vpack.c.bf16 %v1316, %v1316
    %1319 = vrot.lane.b32.xlu0 %v1317, 32
    %v1320 = vpop.permute.xlu0 %1319
    %v1322 = vsel %vm300, %v1320, 0
    %1324 = vmatprep.subr.bf16.mxu0 0
    %1325 = vmatpush1.bf16.msra.mxu0 0
    %1326 = vmatprep.subr.bf16.mxu0 0
    %1327 = vmatpush1.bf16.msra.mxu0 0
    %1328 = vmatprep.subr.bf16.mxu0 0
    %1329 = vmatpush1.bf16.msra.mxu0 0
    %1330 = vmatprep.subr.bf16.mxu0 0
    %1331 = vmatpush1.bf16.msra.mxu0 0
    %1332 = vmatprep.subr.bf16.mxu0 0
    %1333 = vmatpush1.bf16.msra.mxu0 0
    %1334 = vmatprep.subr.bf16.mxu0 0
    %1335 = vmatpush1.bf16.msra.mxu0 0
    %1336 = vmatprep.subr.bf16.mxu0 0
    %1337 = vmatpush1.bf16.msra.mxu0 %v44
    %1338 = vmatprep.subr.bf16.mxu0 0
    %1339 = vmatpush1.bf16.msra.mxu0 %v43
    %1340 = vmatprep.subr.bf16.mxu0 0
    %1341 = vmatpush2.bf16.msra.mxu0 0
    %1342 = vmatprep.subr.bf16.mxu0 0
    %1343 = vmatpush2.bf16.msra.mxu0 0
    %1344 = vmatprep.subr.bf16.mxu0 0
    %1345 = vmatpush2.bf16.msra.mxu0 0
    %1346 = vmatprep.subr.bf16.mxu0 0
    %1347 = vmatpush2.bf16.msra.mxu0 0
    %1348 = vmatprep.subr.bf16.mxu0 0
    %1349 = vmatpush2.bf16.msra.mxu0 0
    %1350 = vmatprep.subr.bf16.mxu0 0
    %1351 = vmatpush2.bf16.msra.mxu0 0
    %1352 = vmatprep.subr.bf16.mxu0 0
    %1353 = vmatpush2.bf16.msra.mxu0 0
    %1354 = vmatprep.subr.bf16.mxu0 0
    %1355 = vmatpush2.bf16.msra.mxu0 0
    %1356 = vmatprep.mubr.bf16.mxu0 0
    %1357 = vmatmul.mubr.bf16.gmra.mxu0 %v1322
    %v1358 = vpop.f32.mrf.mxu0
    %v1359 = vadd.f32 0.0, %v1358
    %v1360 = vpop.f32.mrf.mxu0
    %v1361 = vpop.f32.mrf.mxu0
    %v1362 = vpop.f32.mrf.mxu0
    %1363 = vdwg.mxu0
    %v1364 = vadd.f32 %v267, %v1359
    %v1365 = vtanh.pop %v1364
    %v1366 = vmul.f32 %v1365, 0.5
    %v1367 = vadd.f32 %v1366, 0.5
    %v1368 = vmul.f32 %v1367, %v1310
    %1370 = vrot.lane.b32.xlu0 %v1365, 64
    %v1371 = vpop.permute.xlu0 %1370
    %v1373 = vmul.f32 %v1367, %v1371
    %1375 = vrot.lane.b32.xlu0 %v1373, 32
    %v1376 = vpop.permute.xlu0 %1375
    %v1378 = vadd.f32 %v1368, %v1376
    %v1379 = vtanh.pop %v1378
    %1381 = vrot.lane.b32.xlu0 %v1379, 64
    %v1382 = vpop.permute.xlu0 %1381
    %v1384 = vmul.f32 %v1367, %v1382
    %v1385 = vlaneseq
    %v1386 = vshrl.u32 %v1385, 7
    %v1387 = vsub.s32 0, %v1386
    %v1388 = vrot.slane %v49, %v1387
    %1398 = vrot.lane.b32.xlu0 %v1384, 32
    %v1399 = vpop.permute.xlu0 %1398
    %1400 = vrot.lane.b32.xlu0 %v1316, 32
    %v1401 = vpop.permute.xlu0 %1400
    %1402 = vrot.lane.b32.xlu0 %v1248, 32
    %v1403 = vpop.permute.xlu0 %1402
    %1404 = vrot.lane.b32.xlu0 %v1180, 32
    %v1405 = vpop.permute.xlu0 %1404
    %1406 = vrot.lane.b32.xlu0 %v1112, 32
    %v1407 = vpop.permute.xlu0 %1406
    %1408 = vrot.lane.b32.xlu0 %v1044, 32
    %v1409 = vpop.permute.xlu0 %1408
    %1410 = vrot.lane.b32.xlu0 %v976, 32
    %v1411 = vpop.permute.xlu0 %1410
    %1412 = vrot.lane.b32.xlu0 %v908, 32
    %v1413 = vpop.permute.xlu0 %1412
    %1414 = vrot.lane.b32.xlu0 %v840, 32
    %v1415 = vpop.permute.xlu0 %1414
    %v1416 = vsel %vm300, %v1399, 0
    %v1418 = vsel %vm300, %v1401, 0
    %v1420 = vsel %vm300, %v1403, 0
    %v1422 = vsel %vm300, %v1405, 0
    %v1424 = vsel %vm300, %v1407, 0
    %v1426 = vsel %vm300, %v1409, 0
    %v1428 = vsel %vm300, %v1411, 0
    %v1430 = vsel %vm300, %v1413, 0
    %v1432 = vsel %vm300, %v1415, 0
    %1434 = vmatprep.subr.mxu0 0.0
    %1435 = vmatpush1.msra.mxu0 0.0
    %1436 = vmatprep.subr.mxu0 0.0
    %1437 = vmatpush1.msra.mxu0 0.0
    %1438 = vmatprep.subr.mxu0 0.0
    %1439 = vmatpush1.msra.mxu0 0.0
    %1440 = vmatprep.subr.mxu0 0.0
    %1441 = vmatpush1.msra.mxu0 0.0
    %1442 = vmatprep.subr.mxu0 0.0
    %1443 = vmatpush1.msra.mxu0 0.0
    %1444 = vmatprep.subr.mxu0 0.0
    %1445 = vmatpush1.msra.mxu0 0.0
    %1446 = vmatprep.subr.mxu0 0.0
    %1447 = vmatpush1.msra.mxu0 0.0
    %1448 = vmatprep.subr.mxu0 0.0
    %1449 = vmatpush1.msra.mxu0 0.0
    %1450 = vmatprep.subr.mxu0 0.0
    %1451 = vmatpush1.msra.mxu0 0.0
    %1452 = vmatprep.subr.mxu0 0.0
    %1453 = vmatpush1.msra.mxu0 0.0
    %1454 = vmatprep.subr.mxu0 0.0
    %1455 = vmatpush1.msra.mxu0 0.0
    %1456 = vmatprep.subr.mxu0 0.0
    %1457 = vmatpush1.msra.mxu0 0.0
    %1458 = vmatprep.subr.mxu0 0.0
    %1459 = vmatpush1.msra.mxu0 %v48
    %1460 = vmatprep.subr.mxu0 0.0
    %1461 = vmatpush1.msra.mxu0 %v47
    %1462 = vmatprep.subr.mxu0 0.0
    %1463 = vmatpush1.msra.mxu0 %v46
    %1464 = vmatprep.subr.mxu0 0.0
    %1465 = vmatpush1.msra.mxu0 %v45
    %1466 = vmatprep.subr.mxu0 0.0
    %1467 = vmatpush2.msra.mxu0 0.0
    %1468 = vmatprep.subr.mxu0 0.0
    %1469 = vmatpush2.msra.mxu0 0.0
    %1470 = vmatprep.subr.mxu0 0.0
    %1471 = vmatpush2.msra.mxu0 0.0
    %1472 = vmatprep.subr.mxu0 0.0
    %1473 = vmatpush2.msra.mxu0 0.0
    %1474 = vmatprep.subr.mxu0 0.0
    %1475 = vmatpush2.msra.mxu0 0.0
    %1476 = vmatprep.subr.mxu0 0.0
    %1477 = vmatpush2.msra.mxu0 0.0
    %1478 = vmatprep.subr.mxu0 0.0
    %1479 = vmatpush2.msra.mxu0 0.0
    %1480 = vmatprep.subr.mxu0 0.0
    %1481 = vmatpush2.msra.mxu0 0.0
    %1482 = vmatprep.subr.mxu0 0.0
    %1483 = vmatpush2.msra.mxu0 0.0
    %1484 = vmatprep.subr.mxu0 0.0
    %1485 = vmatpush2.msra.mxu0 0.0
    %1486 = vmatprep.subr.mxu0 0.0
    %1487 = vmatpush2.msra.mxu0 0.0
    %1488 = vmatprep.subr.mxu0 0.0
    %1489 = vmatpush2.msra.mxu0 0.0
    %1490 = vmatprep.subr.mxu0 0.0
    %1491 = vmatpush2.msra.mxu0 0.0
    %1492 = vmatprep.subr.mxu0 0.0
    %1493 = vmatpush2.msra.mxu0 0.0
    %1494 = vmatprep.subr.mxu0 0.0
    %1495 = vmatpush2.msra.mxu0 0.0
    %1496 = vmatprep.subr.mxu0 0.0
    %1497 = vmatpush2.msra.mxu0 0.0
    %1498 = vmatprep.mubr.f32.mxu0 0.0
    %1499 = vmatmul.mubr.f32.gmra.mxu0 %v1416
    %v1500 = vpop.f32.mrf.mxu0
    %v1501 = vadd.f32 %v1388, %v1500
    %v1502 = vpop.f32.mrf.mxu0
    %1503 = vmatprep.mubr.f32.mxu0 0.0
    %1504 = vmatmul.mubr.f32.gmra.mxu0 %v1418
    %v1505 = vpop.f32.mrf.mxu0
    %v1506 = vadd.f32 %v1388, %v1505
    %v1507 = vpop.f32.mrf.mxu0
    %1508 = vmatprep.mubr.f32.mxu0 0.0
    %1509 = vmatmul.mubr.f32.gmra.mxu0 %v1420
    %v1510 = vpop.f32.mrf.mxu0
    %v1511 = vadd.f32 %v1388, %v1510
    %v1512 = vpop.f32.mrf.mxu0
    %1513 = vmatprep.mubr.f32.mxu0 0.0
    %1514 = vmatmul.mubr.f32.gmra.mxu0 %v1422
    %v1515 = vpop.f32.mrf.mxu0
    %v1516 = vadd.f32 %v1388, %v1515
    %v1517 = vpop.f32.mrf.mxu0
    %1518 = vmatprep.mubr.f32.mxu0 0.0
    %1519 = vmatmul.mubr.f32.gmra.mxu0 %v1424
    %v1520 = vpop.f32.mrf.mxu0
    %v1521 = vadd.f32 %v1388, %v1520
    %v1522 = vpop.f32.mrf.mxu0
    %1523 = vmatprep.mubr.f32.mxu0 0.0
    %1524 = vmatmul.mubr.f32.gmra.mxu0 %v1426
    %v1525 = vpop.f32.mrf.mxu0
    %v1526 = vadd.f32 %v1388, %v1525
    %v1527 = vpop.f32.mrf.mxu0
    %1528 = vmatprep.mubr.f32.mxu0 0.0
    %1529 = vmatmul.mubr.f32.gmra.mxu0 %v1428
    %v1530 = vpop.f32.mrf.mxu0
    %v1531 = vadd.f32 %v1388, %v1530
    %v1532 = vpop.f32.mrf.mxu0
    %1533 = vmatprep.mubr.f32.mxu0 0.0
    %1534 = vmatmul.mubr.f32.gmra.mxu0 %v1430
    %v1535 = vpop.f32.mrf.mxu0
    %v1536 = vadd.f32 %v1388, %v1535
    %v1537 = vpop.f32.mrf.mxu0
    %1538 = vmatprep.mubr.f32.mxu0 0.0
    %1539 = vmatmul.mubr.f32.gmra.mxu0 %v1432
    %v1540 = vpop.f32.mrf.mxu0
    %v1541 = vadd.f32 %v1388, %v1540
    %v1542 = vpop.f32.mrf.mxu0
    %1543 = vdwg.mxu0
    %vm1544 = vcmask 97344
    %v1545 = vsel %vm1544, %v1541, -inf
    %1546 = vmax.xlane.f32.xlu0 %v1545
    %v1547 = vpop.xlane.xlu0 %1546
    %v1548 = vsub.f32 %v1541, %v1547
    %v1549 = vmul.f32 %v1548, 1.442695
    %v1550 = vpow.pop %v1549
    %1552 = vrot.lane.b32.xlu0 %v1550, 120
    %v1553 = vpop.permute.xlu0 %1552
    %vm1555 = vcmask 31744
    %v1556 = vsel %vm1555, %v1553, 0.0
    %1557 = vadd.xlane.f32.xlu0 %v1556
    %v1558 = vpop.xlane.xlu0 %1557
    %v1559 = vrcp.pop %v1558
    %v1560 = vmul.f32 %v1550, %v1559
    %1562 = vrot.lane.b32.xlu0 %v1388, 124
    %v1563 = vpop.permute.xlu0 %1562
    %v1565 = vmul.f32 %v1560, %v1563
    %1567 = vrot.lane.b32.xlu0 %v1565, 120
    %v1568 = vpop.permute.xlu0 %1567
    %v1570 = vsel %vm1555, %v1568, 0.0
    %1571 = vadd.xlane.f32.xlu0 %v1570
    %v1572 = vpop.xlane.xlu0 %1571
    %v1573 = vld [vmem:[%s1] sm:$0xff]
    %1574 = vrot.lane.b32.xlu0 %v1388, 112
    %v1575 = vpop.permute.xlu0 %1574
    %v1577 = vmul.f32 %v1573, %v1575
    %vm1578 = vcmask 48128
    %v1579 = vsel %vm1578, %v1577, 0.0
    %1580 = vadd.xlane.f32.xlu0 %v1579
    %v1581 = vpop.xlane.xlu0 %1580
    %v1582 = vadd.f32 %v1572, %v1581
    %v1583 = vadd.f32 %v1582, %v1388
    %v1584 = vmul.f32 %v1583, 0.5
    %v1585 = vtanh.pop %v1584
    %v1586 = vmul.f32 %v1585, 0.5
    %v1587 = vadd.f32 %v1586, 0.5
    %1588 = vst [vmem:[%s3] sm:$0xff] 0.0
    %1590 = vst.msk [vmem:[%s3] sm:$0xff] %vm300, %v1415
    %1592 = vrot.lane.b32.xlu0 %v1501, 32
    %v1593 = vpop.permute.xlu0 %1592
    %vm1595 = vcmask 326912
    %1596 = vst.msk [vmem:[%s3] sm:$0xff] %vm1595, %v1593
    %1598 = vrot.lane.b32.xlu0 %v1506, 40
    %v1599 = vpop.permute.xlu0 %1598
    %vm1601 = vcmask 392512
    %1602 = vst.msk [vmem:[%s3] sm:$0xff] %vm1601, %v1599
    %1604 = vrot.lane.b32.xlu0 %v1511, 48
    %v1605 = vpop.permute.xlu0 %1604
    %vm1607 = vcmask 458112
    %1608 = vst.msk [vmem:[%s3] sm:$0xff] %vm1607, %v1605
    %1610 = vrot.lane.b32.xlu0 %v1516, 56
    %v1611 = vpop.permute.xlu0 %1610
    %vm1613 = vcmask 523712
    %1614 = vst.msk [vmem:[%s3] sm:$0xff] %vm1613, %v1611
    %1616 = vrot.lane.b32.xlu0 %v1521, 64
    %v1617 = vpop.permute.xlu0 %1616
    %vm1619 = vcmask 589312
    %1620 = vst.msk [vmem:[%s3] sm:$0xff] %vm1619, %v1617
    %1622 = vrot.lane.b32.xlu0 %v1526, 72
    %v1623 = vpop.permute.xlu0 %1622
    %vm1625 = vcmask 654912
    %1626 = vst.msk [vmem:[%s3] sm:$0xff] %vm1625, %v1623
    %1628 = vrot.lane.b32.xlu0 %v1531, 80
    %v1629 = vpop.permute.xlu0 %1628
    %vm1631 = vcmask 720512
    %1632 = vst.msk [vmem:[%s3] sm:$0xff] %vm1631, %v1629
    %1634 = vrot.lane.b32.xlu0 %v1536, 88
    %v1635 = vpop.permute.xlu0 %1634
    %vm1637 = vcmask 786112
    %1638 = vst.msk [vmem:[%s3] sm:$0xff] %vm1637, %v1635
    %1640 = vrot.lane.b32.xlu0 %v1541, 88
    %v1641 = vpop.permute.xlu0 %1640
    %vm1643 = vcmask 818944
    %1644 = vst.msk [vmem:[%s3] sm:$0xff] %vm1643, %v1641
    %1646 = vrot.lane.b32.xlu0 %v1587, 78
    %v1647 = vpop.permute.xlu0 %1646
    %vm1649 = vcmask 827168
    %1650 = vst.msk [vmem:[%s3] sm:$0xff] %vm1649, %v1647
    // Predicated region
    $region18: #{model2_outcome_logistic_regression.1} parent=1 // pred_check
      _
    $region19: #{model2_outcome_logistic_regression.1} parent=1 // pred_check_branch
      %1652 = sbr.rel (0) target = $region21
    $region20: #{model2_outcome_logistic_regression.1} parent=1 // pred_region
      _
    $region21: #{model2_outcome_logistic_regression.1} parent=1 // pred_fallthru
      _
    // Predicated region
    $region22: #{model2_outcome_logistic_regression.1} parent=1 // pred_check
      _
    $region23: #{model2_outcome_logistic_regression.1} parent=1 // pred_check_branch
      %1654 = sbr.rel (0) target = $region25
    $region24: #{model2_outcome_logistic_regression.1} parent=1 // pred_region
      _
    $region25: #{model2_outcome_logistic_regression.1} parent=1 // pred_fallthru
      _
    %1655 = vsyncpa [#allocation3], 1

</llo_original>
